<compile_context>
chip_gen: v5e
topology: v5e:2x2
jax: 0.10.0
libtpu: 0.0.40
codegen_flags: <defaults>
</compile_context>

<pallas_src>
import functools

import jax
import jax.numpy as jnp
from jax.experimental import pallas as pl
from jax.experimental.pallas import tpu as pltpu


def _round_up(x, m):
    return ((x + m - 1) // m) * m


# ---------------------------------------------------------------------------
# Kernel A: fused  stem-matmul -> SiLU -> head-matmul -> SiLU -> avg-pool
# ---------------------------------------------------------------------------
def fused_stem_head_pool_kernel(p_ref, ws_ref, bs_ref, wh_ref, bh_ref, o_ref,
                                *, hw_valid, t_hw, inv_hw):
    i = pl.program_id(2)                     # spatial (reduction) step

    # stem 3x3/s2 conv tile: im2col matmul (bf16 in, f32 acc) + BN bias + SiLU.
    h = jnp.dot(p_ref[...], ws_ref[...], preferred_element_type=jnp.float32)
    h = h + bs_ref[...]                      # BN scale already folded into weights
    h = h * jax.nn.sigmoid(h)                # SiLU

    # head 1x1 conv, one 128-channel tile: bf16 matmul + BN bias + SiLU.
    y = jnp.dot(h.astype(jnp.bfloat16), wh_ref[...],
                preferred_element_type=jnp.float32)
    y = y + bh_ref[...]
    y = y * jax.nn.sigmoid(y)

    if hw_valid % t_hw != 0:                 # static: mask spatial padding rows
        row = jax.lax.broadcasted_iota(jnp.int32, y.shape, 0) + i * t_hw
        y = jnp.where(row < hw_valid, y, 0.0)

    part = jnp.sum(y, axis=0, keepdims=True)     # [1, tn] partial pooled sum

    @pl.when(i == 0)
    def _init():
        o_ref[...] = jnp.zeros_like(o_ref)

    o_ref[...] += part                       # output block resident across i

    @pl.when(i == pl.num_programs(2) - 1)
    def _finalize():
        o_ref[...] *= inv_hw                 # sum -> mean (adaptive avg pool)


def fused_stem_head_pool(patches, w_stem, b_stem, w_head, b_head, *,
                         hw_valid, t_hw, tn=128):
    B, hw_pad, K = patches.shape
    C_stem = w_stem.shape[1]
    N = w_head.shape[1]
    assert N % tn == 0 and hw_pad % t_hw == 0
    n_blocks = N // tn
    hw_blocks = hw_pad // t_hw

    kernel = functools.partial(fused_stem_head_pool_kernel,
                               hw_valid=hw_valid, t_hw=t_hw,
                               inv_hw=1.0 / hw_valid)

    pooled4 = pl.pallas_call(
        kernel,
        out_shape=jax.ShapeDtypeStruct((B, n_blocks, 1, tn), jnp.float32),
        grid=(B, n_blocks, hw_blocks),
        in_specs=[
            pl.BlockSpec((None, t_hw, K), lambda b, j, i: (b, i, 0)),   # patches
            pl.BlockSpec((K, C_stem), lambda b, j, i: (0, 0)),          # w_stem
            pl.BlockSpec((1, C_stem), lambda b, j, i: (0, 0)),          # b_stem
            pl.BlockSpec((C_stem, tn), lambda b, j, i: (0, j)),         # w_head tile
            pl.BlockSpec((1, tn), lambda b, j, i: (0, j)),              # b_head tile
        ],
        out_specs=pl.BlockSpec((None, None, 1, tn),
                               lambda b, j, i: (b, j, 0, 0)),
        compiler_params=pltpu.CompilerParams(
            dimension_semantics=("parallel", "parallel", "arbitrary")),
    )(patches, w_stem, b_stem, w_head, b_head)
    return pooled4.reshape(B, N)             # [B, 1408] pooled features


# ---------------------------------------------------------------------------
# Kernel B: Linear(1408 -> n_classes, lane-padded) + LogSoftmax(dim=1)
# ---------------------------------------------------------------------------
def classifier_kernel(pooled_ref, wc_ref, bc_ref, o_ref):
    logits = jnp.dot(pooled_ref[...], wc_ref[...],
                     preferred_element_type=jnp.float32) + bc_ref[...]
    m = jnp.max(logits, axis=-1, keepdims=True)      # stable log-softmax
    z = logits - m
    lse = jnp.log(jnp.sum(jnp.exp(z), axis=-1, keepdims=True))
    o_ref[...] = (z - lse).astype(o_ref.dtype)


def classifier_logsoftmax(pooled, wc_pad, bc_pad, n_classes):
    B = pooled.shape[0]
    n_pad = wc_pad.shape[1]
    out = pl.pallas_call(
        classifier_kernel,
        out_shape=jax.ShapeDtypeStruct((B, n_pad), jnp.float32),
    )(pooled, wc_pad, bc_pad)
    return out[:, :n_classes]                # drop padded (-inf-ish) columns


# ---------------------------------------------------------------------------
# Glue: im2col, BN folding, param init, full forward
# ---------------------------------------------------------------------------
def im2col_nhwc(x, ksize, stride, pad):
    B, H, W, C = x.shape
    xp = jnp.pad(x, ((0, 0), (pad, pad), (pad, pad), (0, 0)))
    Ho = (H + 2 * pad - ksize) // stride + 1
    Wo = (W + 2 * pad - ksize) // stride + 1
    cols = []
    for kh in range(ksize):
        for kw in range(ksize):
            cols.append(xp[:, kh:kh + stride * Ho:stride,
                           kw:kw + stride * Wo:stride, :])
    patches = jnp.concatenate(cols, axis=-1)         # [B,Ho,Wo,k*k*C] (kh,kw,c)
    return patches.reshape(B, Ho * Wo, ksize * ksize * C), Ho, Wo


def fold_bn(gamma, beta, mean, var, eps=1e-5):
    scale = gamma / jnp.sqrt(var + eps)
    bias = beta - mean * scale
    return scale.reshape(1, -1), bias.reshape(1, -1)


def init_params(key, n_classes=4):
    ks = jax.random.split(key, 8)
    p = {}
    # stem conv: Conv2d(3, 32, 3, stride=2, padding=1)   (PyTorch OIHW)
    w_stem = jax.random.normal(ks[0], (32, 3, 3, 3), jnp.float32) * 0.1
    w_stem = jnp.transpose(w_stem, (2, 3, 1, 0)).reshape(27, 32)   # (kh,kw,cin)->out
    s1, b1 = fold_bn(1.0 + 0.1 * jax.random.normal(ks[1], (32,)),
                     0.1 * jax.random.normal(ks[2], (32,)),
                     jnp.zeros((32,)), jnp.ones((32,)))
    p["w_stem"] = (w_stem * s1).astype(jnp.bfloat16)   # BN scale folded, bf16 MXU
    p["b_stem"] = b1                                    # [1, 32] f32
    # head 1x1 conv -> 1408 channels (+ folded BN)
    w_head = jax.random.normal(ks[3], (1408, 32, 1, 1), jnp.float32) * 0.05
    w_head = jnp.transpose(w_head.reshape(1408, 32), (1, 0))       # [32, 1408]
    s2, b2 = fold_bn(1.0 + 0.1 * jax.random.normal(ks[4], (1408,)),
                     0.1 * jax.random.normal(ks[5], (1408,)),
                     jnp.zeros((1408,)), jnp.ones((1408,)))
    p["w_head"] = (w_head * s2).astype(jnp.bfloat16)
    p["b_head"] = b2                                    # [1, 1408] f32
    # classifier: Linear(1408, n_classes) padded to 128 output lanes
    wc = jax.random.normal(ks[6], (n_classes, 1408), jnp.float32) * 0.05
    bc = 0.1 * jax.random.normal(ks[7], (n_classes,))
    n_pad = _round_up(n_classes, 128)
    p["wc"] = jnp.zeros((1408, n_pad), jnp.float32).at[:, :n_classes].set(wc.T)
    p["bc"] = jnp.full((1, n_pad), -1e30, jnp.float32).at[0, :n_classes].set(bc)
    return p


def forward(x_nchw, params, *, n_classes):
    B = x_nchw.shape[0]
    x = jnp.transpose(x_nchw, (0, 2, 3, 1)).astype(jnp.float32)    # NCHW -> NHWC
    # im2col for the stem conv; K stays at 27 (no wrapper-side zero pad).
    patches, Ho, Wo = im2col_nhwc(x, ksize=3, stride=2, pad=1)     # [B, Ho*Wo, 27]
    hw = Ho * Wo
    t_hw = min(256, _round_up(hw, 16))                 # big, sublane-aligned tiles
    hw_pad = _round_up(hw, t_hw)
    if hw_pad != hw:
        patches = jnp.pad(patches, ((0, 0), (0, hw_pad - hw), (0, 0)))
    patches = patches.astype(jnp.bfloat16)             # halve HBM read traffic
    # TODO(synk): EfficientNet-B2 MBConv backbone stages omitted here.
    pooled = fused_stem_head_pool(patches, params["w_stem"], params["b_stem"],
                                  params["w_head"], params["b_head"],
                                  hw_valid=hw, t_hw=t_hw)          # [B, 1408]
    return classifier_logsoftmax(pooled, params["wc"], params["bc"], n_classes)


if __name__ == "__main__":
    key = jax.random.PRNGKey(0)
    k_in, k_par = jax.random.split(key)
    n_classes = 4
    x = jax.random.normal(k_in, (2, 3, 32, 32), jnp.float32)       # small NCHW input
    params = init_params(k_par, n_classes=n_classes)

    fwd = jax.jit(functools.partial(forward, n_classes=n_classes))
    out = jax.block_until_ready(fwd(x, params))

    assert out.shape == (2, n_classes)
    # log-softmax rows must exponentiate-sum to 1
    row_sums = jnp.sum(jnp.exp(out), axis=1)
    assert bool(jnp.all(jnp.abs(row_sums - 1.0) < 1e-3))
    print("KERNEL_OK")
</pallas_src>

<mosaic_0001>
module attributes {stable_mosaic.version = 11 : i64} {
  func.func @fused_stem_head_pool_kernel(%arg0: i32, %arg1: i32, %arg2: i32, %arg3: memref<1x256x27xbf16, #tpu.memory_space<vmem>>, %arg4: memref<27x32xbf16, #tpu.memory_space<vmem>>, %arg5: memref<1x32xf32, #tpu.memory_space<vmem>>, %arg6: memref<32x128xbf16, #tpu.memory_space<vmem>>, %arg7: memref<1x128xf32, #tpu.memory_space<vmem>>, %arg8: memref<1x1x1x128xf32, #tpu.memory_space<vmem>>) attributes {dimension_semantics = [#tpu.dimension_semantics<parallel>, #tpu.dimension_semantics<parallel>, #tpu.dimension_semantics<arbitrary>], iteration_bounds = array<i64: 2, 11, 1>, scalar_prefetch = 0 : i64, scratch_operands = 0 : i64, tpu.core_type = #tpu.core_type<tc>, window_params = [{transform_indices = @transform_0, window_bounds = array<i64: 1, 256, 27>}, {pipeline_mode = #tpu.pipeline_mode<synchronous>, transform_indices = @transform_1, window_bounds = array<i64: 27, 32>}, {pipeline_mode = #tpu.pipeline_mode<synchronous>, transform_indices = @transform_2, window_bounds = array<i64: 1, 32>}, {transform_indices = @transform_3, window_bounds = array<i64: 32, 128>}, {transform_indices = @transform_4, window_bounds = array<i64: 1, 128>}, {transform_indices = @transform_5, window_bounds = array<i64: 1, 1, 1, 128>}]} {
    %c0 = arith.constant 0 : index
    %c0_0 = arith.constant 0 : index
    %c0_1 = arith.constant 0 : index
    %0 = vector.load %arg3[%c0, %c0_0, %c0_1] : memref<1x256x27xbf16, #tpu.memory_space<vmem>>, vector<1x256x27xbf16>
    %1 = vector.shape_cast %0 : vector<1x256x27xbf16> to vector<256x27xbf16>
    %c0_2 = arith.constant 0 : index
    %c0_3 = arith.constant 0 : index
    %2 = vector.load %arg4[%c0_2, %c0_3] : memref<27x32xbf16, #tpu.memory_space<vmem>>, vector<27x32xbf16>
    %cst = arith.constant dense<0.000000e+00> : vector<256x32xf32>
    %3 = tpu.matmul %1, %2, %cst {dimension_numbers = #tpu.dot_dimension_numbers<[1], [0], [0], [1], [0, 0, 1, 1], [], []>} : vector<256x27xbf16>, vector<27x32xbf16>, vector<256x32xf32> -> vector<256x32xf32>
    %c0_4 = arith.constant 0 : index
    %c0_5 = arith.constant 0 : index
    %4 = vector.load %arg5[%c0_4, %c0_5] : memref<1x32xf32, #tpu.memory_space<vmem>>, vector<1x32xf32>
    %5 = vector.broadcast %4 : vector<1x32xf32> to vector<256x32xf32>
    %6 = arith.addf %3, %5 : vector<256x32xf32>
    %7 = arith.negf %6 : vector<256x32xf32>
    %8 = math.exp %7 : vector<256x32xf32>
    %cst_6 = arith.constant 1.000000e+00 : f32
    %9 = vector.broadcast %cst_6 : f32 to vector<256x32xf32>
    %10 = arith.addf %9, %8 : vector<256x32xf32>
    %11 = arith.divf %9, %10 : vector<256x32xf32>
    %12 = arith.mulf %6, %11 : vector<256x32xf32>
    %13 = arith.truncf %12 : vector<256x32xf32> to vector<256x32xbf16>
    %c0_7 = arith.constant 0 : index
    %c0_8 = arith.constant 0 : index
    %14 = vector.load %arg6[%c0_7, %c0_8] : memref<32x128xbf16, #tpu.memory_space<vmem>>, vector<32x128xbf16>
    %cst_9 = arith.constant dense<0.000000e+00> : vector<256x128xf32>
    %15 = tpu.matmul %13, %14, %cst_9 {dimension_numbers = #tpu.dot_dimension_numbers<[1], [0], [0], [1], [0, 0, 1, 1], [], []>} : vector<256x32xbf16>, vector<32x128xbf16>, vector<256x128xf32> -> vector<256x128xf32>
    %c0_10 = arith.constant 0 : index
    %c0_11 = arith.constant 0 : index
    %16 = vector.load %arg7[%c0_10, %c0_11] : memref<1x128xf32, #tpu.memory_space<vmem>>, vector<1x128xf32>
    %17 = vector.broadcast %16 : vector<1x128xf32> to vector<256x128xf32>
    %18 = arith.addf %15, %17 : vector<256x128xf32>
    %19 = arith.negf %18 : vector<256x128xf32>
    %20 = math.exp %19 : vector<256x128xf32>
    %cst_12 = arith.constant 1.000000e+00 : f32
    %21 = vector.broadcast %cst_12 : f32 to vector<256x128xf32>
    %22 = arith.addf %21, %20 : vector<256x128xf32>
    %23 = arith.divf %21, %22 : vector<256x128xf32>
    %24 = arith.mulf %18, %23 : vector<256x128xf32>
    %cst_13 = arith.constant dense<0.000000e+00> : vector<128xf32>
    %25 = vector.multi_reduction <add>, %24, %cst_13 [0] : vector<256x128xf32> to vector<128xf32>
    %26 = vector.shape_cast %25 : vector<128xf32> to vector<1x128xf32>
    %c0_i32 = arith.constant 0 : i32
    %27 = arith.cmpi eq, %arg2, %c0_i32 : i32
    %28 = arith.extui %27 : i1 to i32
    %c0_i32_14 = arith.constant 0 : i32
    %29 = arith.cmpi ne, %28, %c0_i32_14 : i32
    scf.if %29 {
      %cst_25 = arith.constant 0.000000e+00 : f32
      %39 = vector.broadcast %cst_25 : f32 to vector<1x128xf32>
      %c0_26 = arith.constant 0 : index
      %c0_27 = arith.constant 0 : index
      %c0_28 = arith.constant 0 : index
      %c0_29 = arith.constant 0 : index
      %40 = vector.load %arg8[%c0_26, %c0_27, %c0_28, %c0_29] : memref<1x1x1x128xf32, #tpu.memory_space<vmem>>, vector<1x1x1x128xf32>
      %41 = vector.shape_cast %40 : vector<1x1x1x128xf32> to vector<1x128xf32>
      %42 = vector.shape_cast %39 : vector<1x128xf32> to vector<1x1x1x128xf32>
      tpu.vector_store %arg8[%c0_26, %c0_27, %c0_28, %c0_29], %42 {strides = array<i32>} : memref<1x1x1x128xf32, #tpu.memory_space<vmem>>, vector<1x1x1x128xf32>,
    } else {
    }
    %c0_15 = arith.constant 0 : index
    %c0_16 = arith.constant 0 : index
    %c0_17 = arith.constant 0 : index
    %c0_18 = arith.constant 0 : index
    %30 = vector.load %arg8[%c0_15, %c0_16, %c0_17, %c0_18] : memref<1x1x1x128xf32, #tpu.memory_space<vmem>>, vector<1x1x1x128xf32>
    %31 = vector.shape_cast %30 : vector<1x1x1x128xf32> to vector<1x128xf32>
    %32 = arith.addf %31, %26 : vector<1x128xf32>
    %c0_19 = arith.constant 0 : index
    %c0_20 = arith.constant 0 : index
    %c0_21 = arith.constant 0 : index
    %c0_22 = arith.constant 0 : index
    %33 = vector.load %arg8[%c0_19, %c0_20, %c0_21, %c0_22] : memref<1x1x1x128xf32, #tpu.memory_space<vmem>>, vector<1x1x1x128xf32>
    %34 = vector.shape_cast %33 : vector<1x1x1x128xf32> to vector<1x128xf32>
    %35 = vector.shape_cast %32 : vector<1x128xf32> to vector<1x1x1x128xf32>
    tpu.vector_store %arg8[%c0_19, %c0_20, %c0_21, %c0_22], %35 {strides = array<i32>} : memref<1x1x1x128xf32, #tpu.memory_space<vmem>>, vector<1x1x1x128xf32>,
    %c0_i32_23 = arith.constant 0 : i32
    %36 = arith.cmpi eq, %arg2, %c0_i32_23 : i32
    %37 = arith.extui %36 : i1 to i32
    %c0_i32_24 = arith.constant 0 : i32
    %38 = arith.cmpi ne, %37, %c0_i32_24 : i32
    scf.if %38 {
      %c0_25 = arith.constant 0 : index
      %c0_26 = arith.constant 0 : index
      %c0_27 = arith.constant 0 : index
      %c0_28 = arith.constant 0 : index
      %39 = vector.load %arg8[%c0_25, %c0_26, %c0_27, %c0_28] : memref<1x1x1x128xf32, #tpu.memory_space<vmem>>, vector<1x1x1x128xf32>
      %40 = vector.shape_cast %39 : vector<1x1x1x128xf32> to vector<1x128xf32>
      %cst_29 = arith.constant 3.906250e-03 : f32
      %41 = vector.broadcast %cst_29 : f32 to vector<1x128xf32>
      %42 = arith.mulf %40, %41 : vector<1x128xf32>
      %c0_30 = arith.constant 0 : index
      %c0_31 = arith.constant 0 : index
      %c0_32 = arith.constant 0 : index
      %c0_33 = arith.constant 0 : index
      %43 = vector.load %arg8[%c0_30, %c0_31, %c0_32, %c0_33] : memref<1x1x1x128xf32, #tpu.memory_space<vmem>>, vector<1x1x1x128xf32>
      %44 = vector.shape_cast %43 : vector<1x1x1x128xf32> to vector<1x128xf32>
      %45 = vector.shape_cast %42 : vector<1x128xf32> to vector<1x1x1x128xf32>
      tpu.vector_store %arg8[%c0_30, %c0_31, %c0_32, %c0_33], %45 {strides = array<i32>} : memref<1x1x1x128xf32, #tpu.memory_space<vmem>>, vector<1x1x1x128xf32>,
    } else {
    }
    return
  }
  func.func @transform_0(%arg0: i32, %arg1: i32, %arg2: i32) -> (i32, i32, i32) {
    %c0_i32 = arith.constant 0 : i32
    %c0_i32_0 = arith.constant 0 : i32
    return %arg0, %arg2, %c0_i32 : i32, i32, i32
  }
  func.func @transform_1(%arg0: i32, %arg1: i32, %arg2: i32) -> (i32, i32) {
    %c0_i32 = arith.constant 0 : i32
    %c0_i32_0 = arith.constant 0 : i32
    %c0_i32_1 = arith.constant 0 : i32
    return %c0_i32, %c0_i32_0 : i32, i32
  }
  func.func @transform_2(%arg0: i32, %arg1: i32, %arg2: i32) -> (i32, i32) {
    %c0_i32 = arith.constant 0 : i32
    %c0_i32_0 = arith.constant 0 : i32
    %c0_i32_1 = arith.constant 0 : i32
    return %c0_i32, %c0_i32_0 : i32, i32
  }
  func.func @transform_3(%arg0: i32, %arg1: i32, %arg2: i32) -> (i32, i32) {
    %c0_i32 = arith.constant 0 : i32
    %c0_i32_0 = arith.constant 0 : i32
    return %c0_i32, %arg1 : i32, i32
  }
  func.func @transform_4(%arg0: i32, %arg1: i32, %arg2: i32) -> (i32, i32) {
    %c0_i32 = arith.constant 0 : i32
    %c0_i32_0 = arith.constant 0 : i32
    return %c0_i32, %arg1 : i32, i32
  }
  func.func @transform_5(%arg0: i32, %arg1: i32, %arg2: i32) -> (i32, i32, i32, i32) {
    %c0_i32 = arith.constant 0 : i32
    %c0_i32_0 = arith.constant 0 : i32
    %c0_i32_1 = arith.constant 0 : i32
    return %arg0, %arg1, %c0_i32, %c0_i32_0 : i32, i32, i32, i32
  }
}

module attributes {stable_mosaic.version = 11 : i64} {
  func.func @classifier_kernel(%arg0: memref<2x1408xf32, #tpu.memory_space<vmem>>, %arg1: memref<1408x128xf32, #tpu.memory_space<vmem>>, %arg2: memref<1x128xf32, #tpu.memory_space<vmem>>, %arg3: memref<2x128xf32, #tpu.memory_space<vmem>>) attributes {dimension_semantics = [], scalar_prefetch = 0 : i64, scratch_operands = 0 : i64, tpu.core_type = #tpu.core_type<tc>} {
    %c0 = arith.constant 0 : index
    %c0_0 = arith.constant 0 : index
    %0 = vector.load %arg0[%c0, %c0_0] : memref<2x1408xf32, #tpu.memory_space<vmem>>, vector<2x1408xf32>
    %c0_1 = arith.constant 0 : index
    %c0_2 = arith.constant 0 : index
    %1 = vector.load %arg1[%c0_1, %c0_2] : memref<1408x128xf32, #tpu.memory_space<vmem>>, vector<1408x128xf32>
    %cst = arith.constant dense<0.000000e+00> : vector<2x128xf32>
    %2 = tpu.matmul %0, %1, %cst {dimension_numbers = #tpu.dot_dimension_numbers<[1], [0], [0], [1], [0, 0, 1, 1], [], []>} : vector<2x1408xf32>, vector<1408x128xf32>, vector<2x128xf32> -> vector<2x128xf32>
    %c0_3 = arith.constant 0 : index
    %c0_4 = arith.constant 0 : index
    %3 = vector.load %arg2[%c0_3, %c0_4] : memref<1x128xf32, #tpu.memory_space<vmem>>, vector<1x128xf32>
    %4 = vector.broadcast %3 : vector<1x128xf32> to vector<2x128xf32>
    %5 = arith.addf %2, %4 : vector<2x128xf32>
    %cst_5 = arith.constant dense<0xFF800000> : vector<2xf32>
    %6 = vector.multi_reduction <maximumf>, %5, %cst_5 [1] : vector<2x128xf32> to vector<2xf32>
    %7 = vector.shape_cast %6 : vector<2xf32> to vector<2x1xf32>
    %8 = vector.broadcast %7 : vector<2x1xf32> to vector<2x128xf32>
    %9 = arith.subf %5, %8 : vector<2x128xf32>
    %10 = math.exp %9 : vector<2x128xf32>
    %cst_6 = arith.constant dense<0.000000e+00> : vector<2xf32>
    %11 = vector.multi_reduction <add>, %10, %cst_6 [1] : vector<2x128xf32> to vector<2xf32>
    %12 = vector.shape_cast %11 : vector<2xf32> to vector<2x1xf32>
    %13 = math.log %12 : vector<2x1xf32>
    %14 = vector.broadcast %13 : vector<2x1xf32> to vector<2x128xf32>
    %15 = arith.subf %9, %14 : vector<2x128xf32>
    %c0_7 = arith.constant 0 : index
    %c0_8 = arith.constant 0 : index
    %16 = vector.load %arg3[%c0_7, %c0_8] : memref<2x128xf32, #tpu.memory_space<vmem>>, vector<2x128xf32>
    tpu.vector_store %arg3[%c0_7, %c0_8], %15 {strides = array<i32>} : memref<2x128xf32, #tpu.memory_space<vmem>>, vector<2x128xf32>,
    return
  }
}

</mosaic_0001>

<llo_original>
// kernel: forward.3
$region0: #{forward.3}
  #allocation0 [shape = 'u32[]', space=smem, size = 0x4, offset = 0x4, fixed_abs, tag = 'smem constant byte address 0x4 - core index']
  #allocation1 [shape = 'u32[72,128]{1,0:T(1,128)}', space=vmem, size = 0x9000, scoped, tag = 'internal scratch']
  %s0 = inlined_call_operand.vmem [shape: f32[2,1408], index: 0, kind: input, shape index: {}]
  %s1 = inlined_call_operand.vmem [shape: f32[1408,128], index: 1, kind: input, shape index: {}]
  %s2 = inlined_call_operand.vmem [shape: f32[1,128], index: 2, kind: input, shape index: {}]
  %s3 = inlined_call_operand.hbm [shape: f32[2,128], index: 3, kind: output, shape index: {}]
  %s4 = sld [smem:[#allocation0]]
  $region22: #{forward.3} parent=0
    _
  %s6 = ssub.s32 1, %s4
  %s7 = scalar_select 0, %s6, %s4
  $region1: #{forward.3} parent=0
    #allocation2 [shape = 'u8[1024]{0}', space=vmem, size = 0x400, scoped, tag = 'output window, operand 0, single buffered']
    #allocation3 [shape = 's32[1]{0}', space=sflag, size = 0x4, scoped, tag = 'scoped memory for forward.3']
    %8 = vsyncpa [#allocation3], 0
    // Predicated region
    $region2: #{forward.3} parent=1 // pred_check
      _
    $region3: #{forward.3} parent=1 // pred_check_branch
      %10 = sbr.rel (0) target = $region5
    $region4: #{forward.3} parent=1 // pred_region
      _
    $region5: #{forward.3} parent=1 // pred_fallthru
      _
    // Predicated region
    $region6: #{forward.3} parent=1 // pred_check
      _
    $region7: #{forward.3} parent=1 // pred_check_branch
      %12 = sbr.rel (0) target = $region9
    $region8: #{forward.3} parent=1 // pred_region
      _
    $region9: #{forward.3} parent=1 // pred_fallthru
      _
    // Predicated region
    $region10: #{forward.3} parent=1 // pred_check
      _
    $region11: #{forward.3} parent=1 // pred_check_branch
      %14 = sbr.rel (0) target = $region13
    $region12: #{forward.3} parent=1 // pred_region
      _
    $region13: #{forward.3} parent=1 // pred_fallthru
      _
    %v15 = vld [vmem:[%s0] sm:$0xff]
    %v16 = vld [vmem:[%s0 + $0x8] sm:$0xff]
    %v17 = vld [vmem:[%s0 + $0x10] sm:$0x3f]
    %v18 = vld [vmem:[%s1] sm:$0xff]
    %v19 = vld [vmem:[%s1 + $0x8] sm:$0xff]
    %v20 = vld [vmem:[%s1 + $0x10] sm:$0xff]
    %v21 = vld [vmem:[%s1 + $0x18] sm:$0xff]
    %v22 = vld [vmem:[%s1 + $0x20] sm:$0xff]
    %v23 = vld [vmem:[%s1 + $0x28] sm:$0xff]
    %v24 = vld [vmem:[%s1 + $0x30] sm:$0xff]
    %v25 = vld [vmem:[%s1 + $0x38] sm:$0xff]
    %v26 = vld [vmem:[%s1 + $0x40] sm:$0xff]
    %v27 = vld [vmem:[%s1 + $0x48] sm:$0xff]
    %v28 = vld [vmem:[%s1 + $0x50] sm:$0xff]
    %v29 = vld [vmem:[%s1 + $0x58] sm:$0xff]
    %v30 = vld [vmem:[%s1 + $0x60] sm:$0xff]
    %v31 = vld [vmem:[%s1 + $0x68] sm:$0xff]
    %v32 = vld [vmem:[%s1 + $0x70] sm:$0xff]
    %v33 = vld [vmem:[%s1 + $0x78] sm:$0xff]
    %v34 = vld [vmem:[%s1 + $0x80] sm:$0xff]
    %v35 = vld [vmem:[%s1 + $0x88] sm:$0xff]
    %v36 = vld [vmem:[%s1 + $0x90] sm:$0xff]
    %v37 = vld [vmem:[%s1 + $0x98] sm:$0xff]
    %v38 = vld [vmem:[%s1 + $0xa0] sm:$0xff]
    %v39 = vld [vmem:[%s1 + $0xa8] sm:$0xff]
    %v40 = vld [vmem:[%s1 + $0xb0] sm:$0xff]
    %v41 = vld [vmem:[%s1 + $0xb8] sm:$0xff]
    %v42 = vld [vmem:[%s1 + $0xc0] sm:$0xff]
    %v43 = vld [vmem:[%s1 + $0xc8] sm:$0xff]
    %v44 = vld [vmem:[%s1 + $0xd0] sm:$0xff]
    %v45 = vld [vmem:[%s1 + $0xd8] sm:$0xff]
    %v46 = vld [vmem:[%s1 + $0xe0] sm:$0xff]
    %v47 = vld [vmem:[%s1 + $0xe8] sm:$0xff]
    %v48 = vld [vmem:[%s1 + $0xf0] sm:$0xff]
    %v49 = vld [vmem:[%s1 + $0xf8] sm:$0xff]
    %v50 = vld [vmem:[%s1 + $0x100] sm:$0xff]
    %v51 = vld [vmem:[%s1 + $0x108] sm:$0xff]
    %v52 = vld [vmem:[%s1 + $0x110] sm:$0xff]
    %v53 = vld [vmem:[%s1 + $0x118] sm:$0xff]
    %v54 = vld [vmem:[%s1 + $0x120] sm:$0xff]
    %v55 = vld [vmem:[%s1 + $0x128] sm:$0xff]
    %v56 = vld [vmem:[%s1 + $0x130] sm:$0xff]
    %v57 = vld [vmem:[%s1 + $0x138] sm:$0xff]
    %v58 = vld [vmem:[%s1 + $0x140] sm:$0xff]
    %v59 = vld [vmem:[%s1 + $0x148] sm:$0xff]
    %v60 = vld [vmem:[%s1 + $0x150] sm:$0xff]
    %v61 = vld [vmem:[%s1 + $0x158] sm:$0xff]
    %v62 = vld [vmem:[%s1 + $0x160] sm:$0xff]
    %v63 = vld [vmem:[%s1 + $0x168] sm:$0xff]
    %v64 = vld [vmem:[%s1 + $0x170] sm:$0xff]
    %v65 = vld [vmem:[%s1 + $0x178] sm:$0xff]
    %v66 = vld [vmem:[%s1 + $0x180] sm:$0xff]
    %v67 = vld [vmem:[%s1 + $0x188] sm:$0xff]
    %v68 = vld [vmem:[%s1 + $0x190] sm:$0xff]
    %v69 = vld [vmem:[%s1 + $0x198] sm:$0xff]
    %v70 = vld [vmem:[%s1 + $0x1a0] sm:$0xff]
    %v71 = vld [vmem:[%s1 + $0x1a8] sm:$0xff]
    %v72 = vld [vmem:[%s1 + $0x1b0] sm:$0xff]
    %v73 = vld [vmem:[%s1 + $0x1b8] sm:$0xff]
    %v74 = vld [vmem:[%s1 + $0x1c0] sm:$0xff]
    %v75 = vld [vmem:[%s1 + $0x1c8] sm:$0xff]
    %v76 = vld [vmem:[%s1 + $0x1d0] sm:$0xff]
    %v77 = vld [vmem:[%s1 + $0x1d8] sm:$0xff]
    %v78 = vld [vmem:[%s1 + $0x1e0] sm:$0xff]
    %v79 = vld [vmem:[%s1 + $0x1e8] sm:$0xff]
    %v80 = vld [vmem:[%s1 + $0x1f0] sm:$0xff]
    %v81 = vld [vmem:[%s1 + $0x1f8] sm:$0xff]
    %v82 = vld [vmem:[%s1 + $0x200] sm:$0xff]
    %v83 = vld [vmem:[%s1 + $0x208] sm:$0xff]
    %v84 = vld [vmem:[%s1 + $0x210] sm:$0xff]
    %v85 = vld [vmem:[%s1 + $0x218] sm:$0xff]
    %v86 = vld [vmem:[%s1 + $0x220] sm:$0xff]
    %v87 = vld [vmem:[%s1 + $0x228] sm:$0xff]
    %v88 = vld [vmem:[%s1 + $0x230] sm:$0xff]
    %v89 = vld [vmem:[%s1 + $0x238] sm:$0xff]
    %v90 = vld [vmem:[%s1 + $0x240] sm:$0xff]
    %v91 = vld [vmem:[%s1 + $0x248] sm:$0xff]
    %v92 = vld [vmem:[%s1 + $0x250] sm:$0xff]
    %v93 = vld [vmem:[%s1 + $0x258] sm:$0xff]
    %v94 = vld [vmem:[%s1 + $0x260] sm:$0xff]
    %v95 = vld [vmem:[%s1 + $0x268] sm:$0xff]
    %v96 = vld [vmem:[%s1 + $0x270] sm:$0xff]
    %v97 = vld [vmem:[%s1 + $0x278] sm:$0xff]
    %v98 = vld [vmem:[%s1 + $0x280] sm:$0xff]
    %v99 = vld [vmem:[%s1 + $0x288] sm:$0xff]
    %v100 = vld [vmem:[%s1 + $0x290] sm:$0xff]
    %v101 = vld [vmem:[%s1 + $0x298] sm:$0xff]
    %v102 = vld [vmem:[%s1 + $0x2a0] sm:$0xff]
    %v103 = vld [vmem:[%s1 + $0x2a8] sm:$0xff]
    %v104 = vld [vmem:[%s1 + $0x2b0] sm:$0xff]
    %v105 = vld [vmem:[%s1 + $0x2b8] sm:$0xff]
    %v106 = vld [vmem:[%s1 + $0x2c0] sm:$0xff]
    %v107 = vld [vmem:[%s1 + $0x2c8] sm:$0xff]
    %v108 = vld [vmem:[%s1 + $0x2d0] sm:$0xff]
    %v109 = vld [vmem:[%s1 + $0x2d8] sm:$0xff]
    %v110 = vld [vmem:[%s1 + $0x2e0] sm:$0xff]
    %v111 = vld [vmem:[%s1 + $0x2e8] sm:$0xff]
    %v112 = vld [vmem:[%s1 + $0x2f0] sm:$0xff]
    %v113 = vld [vmem:[%s1 + $0x2f8] sm:$0xff]
    %v114 = vld [vmem:[%s1 + $0x300] sm:$0xff]
    %v115 = vld [vmem:[%s1 + $0x308] sm:$0xff]
    %v116 = vld [vmem:[%s1 + $0x310] sm:$0xff]
    %v117 = vld [vmem:[%s1 + $0x318] sm:$0xff]
    %v118 = vld [vmem:[%s1 + $0x320] sm:$0xff]
    %v119 = vld [vmem:[%s1 + $0x328] sm:$0xff]
    %v120 = vld [vmem:[%s1 + $0x330] sm:$0xff]
    %v121 = vld [vmem:[%s1 + $0x338] sm:$0xff]
    %v122 = vld [vmem:[%s1 + $0x340] sm:$0xff]
    %v123 = vld [vmem:[%s1 + $0x348] sm:$0xff]
    %v124 = vld [vmem:[%s1 + $0x350] sm:$0xff]
    %v125 = vld [vmem:[%s1 + $0x358] sm:$0xff]
    %v126 = vld [vmem:[%s1 + $0x360] sm:$0xff]
    %v127 = vld [vmem:[%s1 + $0x368] sm:$0xff]
    %v128 = vld [vmem:[%s1 + $0x370] sm:$0xff]
    %v129 = vld [vmem:[%s1 + $0x378] sm:$0xff]
    %v130 = vld [vmem:[%s1 + $0x380] sm:$0xff]
    %v131 = vld [vmem:[%s1 + $0x388] sm:$0xff]
    %v132 = vld [vmem:[%s1 + $0x390] sm:$0xff]
    %v133 = vld [vmem:[%s1 + $0x398] sm:$0xff]
    %v134 = vld [vmem:[%s1 + $0x3a0] sm:$0xff]
    %v135 = vld [vmem:[%s1 + $0x3a8] sm:$0xff]
    %v136 = vld [vmem:[%s1 + $0x3b0] sm:$0xff]
    %v137 = vld [vmem:[%s1 + $0x3b8] sm:$0xff]
    %v138 = vld [vmem:[%s1 + $0x3c0] sm:$0xff]
    %v139 = vld [vmem:[%s1 + $0x3c8] sm:$0xff]
    %v140 = vld [vmem:[%s1 + $0x3d0] sm:$0xff]
    %v141 = vld [vmem:[%s1 + $0x3d8] sm:$0xff]
    %v142 = vld [vmem:[%s1 + $0x3e0] sm:$0xff]
    %v143 = vld [vmem:[%s1 + $0x3e8] sm:$0xff]
    %v144 = vld [vmem:[%s1 + $0x3f0] sm:$0xff]
    %v145 = vld [vmem:[%s1 + $0x3f8] sm:$0xff]
    %v146 = vld [vmem:[%s1 + $0x400] sm:$0xff]
    %v147 = vld [vmem:[%s1 + $0x408] sm:$0xff]
    %v148 = vld [vmem:[%s1 + $0x410] sm:$0xff]
    %v149 = vld [vmem:[%s1 + $0x418] sm:$0xff]
    %v150 = vld [vmem:[%s1 + $0x420] sm:$0xff]
    %v151 = vld [vmem:[%s1 + $0x428] sm:$0xff]
    %v152 = vld [vmem:[%s1 + $0x430] sm:$0xff]
    %v153 = vld [vmem:[%s1 + $0x438] sm:$0xff]
    %v154 = vld [vmem:[%s1 + $0x440] sm:$0xff]
    %v155 = vld [vmem:[%s1 + $0x448] sm:$0xff]
    %v156 = vld [vmem:[%s1 + $0x450] sm:$0xff]
    %v157 = vld [vmem:[%s1 + $0x458] sm:$0xff]
    %v158 = vld [vmem:[%s1 + $0x460] sm:$0xff]
    %v159 = vld [vmem:[%s1 + $0x468] sm:$0xff]
    %v160 = vld [vmem:[%s1 + $0x470] sm:$0xff]
    %v161 = vld [vmem:[%s1 + $0x478] sm:$0xff]
    %v162 = vld [vmem:[%s1 + $0x480] sm:$0xff]
    %v163 = vld [vmem:[%s1 + $0x488] sm:$0xff]
    %v164 = vld [vmem:[%s1 + $0x490] sm:$0xff]
    %v165 = vld [vmem:[%s1 + $0x498] sm:$0xff]
    %v166 = vld [vmem:[%s1 + $0x4a0] sm:$0xff]
    %v167 = vld [vmem:[%s1 + $0x4a8] sm:$0xff]
    %v168 = vld [vmem:[%s1 + $0x4b0] sm:$0xff]
    %v169 = vld [vmem:[%s1 + $0x4b8] sm:$0xff]
    %v170 = vld [vmem:[%s1 + $0x4c0] sm:$0xff]
    %v171 = vld [vmem:[%s1 + $0x4c8] sm:$0xff]
    %v172 = vld [vmem:[%s1 + $0x4d0] sm:$0xff]
    %v173 = vld [vmem:[%s1 + $0x4d8] sm:$0xff]
    %v174 = vld [vmem:[%s1 + $0x4e0] sm:$0xff]
    %v175 = vld [vmem:[%s1 + $0x4e8] sm:$0xff]
    %v176 = vld [vmem:[%s1 + $0x4f0] sm:$0xff]
    %v177 = vld [vmem:[%s1 + $0x4f8] sm:$0xff]
    %v178 = vld [vmem:[%s1 + $0x500] sm:$0xff]
    %v179 = vld [vmem:[%s1 + $0x508] sm:$0xff]
    %v180 = vld [vmem:[%s1 + $0x510] sm:$0xff]
    %v181 = vld [vmem:[%s1 + $0x518] sm:$0xff]
    %v182 = vld [vmem:[%s1 + $0x520] sm:$0xff]
    %v183 = vld [vmem:[%s1 + $0x528] sm:$0xff]
    %v184 = vld [vmem:[%s1 + $0x530] sm:$0xff]
    %v185 = vld [vmem:[%s1 + $0x538] sm:$0xff]
    %v186 = vld [vmem:[%s1 + $0x540] sm:$0xff]
    %v187 = vld [vmem:[%s1 + $0x548] sm:$0xff]
    %v188 = vld [vmem:[%s1 + $0x550] sm:$0xff]
    %v189 = vld [vmem:[%s1 + $0x558] sm:$0xff]
    %v190 = vld [vmem:[%s1 + $0x560] sm:$0xff]
    %v191 = vld [vmem:[%s1 + $0x568] sm:$0xff]
    %v192 = vld [vmem:[%s1 + $0x570] sm:$0xff]
    %v193 = vld [vmem:[%s1 + $0x578] sm:$0xff]
    %v194 = vld [vmem:[%s2] sm:$0x1]
    %v196 = vperm.slane %v194, 0
    %201 = vst [vmem:[#allocation1] ss:$4 sm:$0xff] %v15
    %s202 = scalar_lea.vmem [#allocation1], 32
    %203 = vst [vmem:[%s202] ss:$4 sm:$0xff] %v16
    %v204 = vld.sshfl [vmem:[#allocation1] sm:$0xff pattern:$0x73625140]
    %v205 = vld.sshfl [vmem:[#allocation1 + $0x8] sm:$0xff pattern:$0x73625140]
    %v206 = vld.sshfl [vmem:[#allocation1 + $0x10] sm:$0xff pattern:$0x73625140]
    %v207 = vld.sshfl [vmem:[#allocation1 + $0x18] sm:$0xff pattern:$0x73625140]
    %v208 = vld.sshfl [vmem:[#allocation1 + $0x20] sm:$0xff pattern:$0x73625140]
    %v209 = vld.sshfl [vmem:[#allocation1 + $0x28] sm:$0xff pattern:$0x73625140]
    %v210 = vld.sshfl [vmem:[#allocation1 + $0x30] sm:$0xff pattern:$0x73625140]
    %v211 = vld.sshfl [vmem:[#allocation1 + $0x38] sm:$0xff pattern:$0x73625140]
    %212 = vst [vmem:[#allocation1] ss:$4 sm:$0xff] %v17
    %v213 = vld.sshfl [vmem:[#allocation1] sm:$0xff pattern:$0x73625140]
    %v214 = vld.sshfl [vmem:[#allocation1 + $0x8] sm:$0xff pattern:$0x73625140]
    %v215 = vld.sshfl [vmem:[#allocation1 + $0x10] sm:$0xff pattern:$0x73625140]
    %227 = vmatpush.msra.mxu0 %v33
    %228 = vmatpush.msra.mxu0 %v32
    %229 = vmatpush.msra.mxu0 %v31
    %230 = vmatpush.msra.mxu0 %v30
    %231 = vmatpush.msra.mxu0 %v29
    %232 = vmatpush.msra.mxu0 %v28
    %233 = vmatpush.msra.mxu0 %v27
    %234 = vmatpush.msra.mxu0 %v26
    %235 = vmatpush.msra.mxu0 %v25
    %236 = vmatpush.msra.mxu0 %v24
    %237 = vmatpush.msra.mxu0 %v23
    %238 = vmatpush.msra.mxu0 %v22
    %239 = vmatpush.msra.mxu0 %v21
    %240 = vmatpush.msra.mxu0 %v20
    %241 = vmatpush.msra.mxu0 %v19
    %242 = vmatpush.msra.mxu0 %v18
    %243 = vmatmul.f32.gmra.mxu0 %v204
    %v244 = vpop.f32.mrf.mxu0
    %v245 = vadd.f32 %v196, %v244
    %246 = vdwg.mxu0
    %247 = vmatpush.msra.mxu0 %v49
    %248 = vmatpush.msra.mxu0 %v48
    %249 = vmatpush.msra.mxu0 %v47
    %250 = vmatpush.msra.mxu0 %v46
    %251 = vmatpush.msra.mxu0 %v45
    %252 = vmatpush.msra.mxu0 %v44
    %253 = vmatpush.msra.mxu0 %v43
    %254 = vmatpush.msra.mxu0 %v42
    %255 = vmatpush.msra.mxu0 %v41
    %256 = vmatpush.msra.mxu0 %v40
    %257 = vmatpush.msra.mxu0 %v39
    %258 = vmatpush.msra.mxu0 %v38
    %259 = vmatpush.msra.mxu0 %v37
    %260 = vmatpush.msra.mxu0 %v36
    %261 = vmatpush.msra.mxu0 %v35
    %262 = vmatpush.msra.mxu0 %v34
    %263 = vmatmul.f32.gmra.mxu0 %v205
    %v264 = vpop.f32.mrf.mxu0
    %v265 = vadd.f32 %v245, %v264
    %266 = vdwg.mxu0
    %267 = vmatpush.msra.mxu0 %v65
    %268 = vmatpush.msra.mxu0 %v64
    %269 = vmatpush.msra.mxu0 %v63
    %270 = vmatpush.msra.mxu0 %v62
    %271 = vmatpush.msra.mxu0 %v61
    %272 = vmatpush.msra.mxu0 %v60
    %273 = vmatpush.msra.mxu0 %v59
    %274 = vmatpush.msra.mxu0 %v58
    %275 = vmatpush.msra.mxu0 %v57
    %276 = vmatpush.msra.mxu0 %v56
    %277 = vmatpush.msra.mxu0 %v55
    %278 = vmatpush.msra.mxu0 %v54
    %279 = vmatpush.msra.mxu0 %v53
    %280 = vmatpush.msra.mxu0 %v52
    %281 = vmatpush.msra.mxu0 %v51
    %282 = vmatpush.msra.mxu0 %v50
    %283 = vmatmul.f32.gmra.mxu0 %v206
    %v284 = vpop.f32.mrf.mxu0
    %v285 = vadd.f32 %v265, %v284
    %286 = vdwg.mxu0
    %287 = vmatpush.msra.mxu0 %v81
    %288 = vmatpush.msra.mxu0 %v80
    %289 = vmatpush.msra.mxu0 %v79
    %290 = vmatpush.msra.mxu0 %v78
    %291 = vmatpush.msra.mxu0 %v77
    %292 = vmatpush.msra.mxu0 %v76
    %293 = vmatpush.msra.mxu0 %v75
    %294 = vmatpush.msra.mxu0 %v74
    %295 = vmatpush.msra.mxu0 %v73
    %296 = vmatpush.msra.mxu0 %v72
    %297 = vmatpush.msra.mxu0 %v71
    %298 = vmatpush.msra.mxu0 %v70
    %299 = vmatpush.msra.mxu0 %v69
    %300 = vmatpush.msra.mxu0 %v68
    %301 = vmatpush.msra.mxu0 %v67
    %302 = vmatpush.msra.mxu0 %v66
    %303 = vmatmul.f32.gmra.mxu0 %v207
    %v304 = vpop.f32.mrf.mxu0
    %v305 = vadd.f32 %v285, %v304
    %306 = vdwg.mxu0
    %307 = vmatpush.msra.mxu0 %v97
    %308 = vmatpush.msra.mxu0 %v96
    %309 = vmatpush.msra.mxu0 %v95
    %310 = vmatpush.msra.mxu0 %v94
    %311 = vmatpush.msra.mxu0 %v93
    %312 = vmatpush.msra.mxu0 %v92
    %313 = vmatpush.msra.mxu0 %v91
    %314 = vmatpush.msra.mxu0 %v90
    %315 = vmatpush.msra.mxu0 %v89
    %316 = vmatpush.msra.mxu0 %v88
    %317 = vmatpush.msra.mxu0 %v87
    %318 = vmatpush.msra.mxu0 %v86
    %319 = vmatpush.msra.mxu0 %v85
    %320 = vmatpush.msra.mxu0 %v84
    %321 = vmatpush.msra.mxu0 %v83
    %322 = vmatpush.msra.mxu0 %v82
    %323 = vmatmul.f32.gmra.mxu0 %v208
    %v324 = vpop.f32.mrf.mxu0
    %v325 = vadd.f32 %v305, %v324
    %326 = vdwg.mxu0
    %327 = vmatpush.msra.mxu0 %v113
    %328 = vmatpush.msra.mxu0 %v112
    %329 = vmatpush.msra.mxu0 %v111
    %330 = vmatpush.msra.mxu0 %v110
    %331 = vmatpush.msra.mxu0 %v109
    %332 = vmatpush.msra.mxu0 %v108
    %333 = vmatpush.msra.mxu0 %v107
    %334 = vmatpush.msra.mxu0 %v106
    %335 = vmatpush.msra.mxu0 %v105
    %336 = vmatpush.msra.mxu0 %v104
    %337 = vmatpush.msra.mxu0 %v103
    %338 = vmatpush.msra.mxu0 %v102
    %339 = vmatpush.msra.mxu0 %v101
    %340 = vmatpush.msra.mxu0 %v100
    %341 = vmatpush.msra.mxu0 %v99
    %342 = vmatpush.msra.mxu0 %v98
    %343 = vmatmul.f32.gmra.mxu0 %v209
    %v344 = vpop.f32.mrf.mxu0
    %v345 = vadd.f32 %v325, %v344
    %346 = vdwg.mxu0
    %347 = vmatpush.msra.mxu0 %v129
    %348 = vmatpush.msra.mxu0 %v128
    %349 = vmatpush.msra.mxu0 %v127
    %350 = vmatpush.msra.mxu0 %v126
    %351 = vmatpush.msra.mxu0 %v125
    %352 = vmatpush.msra.mxu0 %v124
    %353 = vmatpush.msra.mxu0 %v123
    %354 = vmatpush.msra.mxu0 %v122
    %355 = vmatpush.msra.mxu0 %v121
    %356 = vmatpush.msra.mxu0 %v120
    %357 = vmatpush.msra.mxu0 %v119
    %358 = vmatpush.msra.mxu0 %v118
    %359 = vmatpush.msra.mxu0 %v117
    %360 = vmatpush.msra.mxu0 %v116
    %361 = vmatpush.msra.mxu0 %v115
    %362 = vmatpush.msra.mxu0 %v114
    %363 = vmatmul.f32.gmra.mxu0 %v210
    %v364 = vpop.f32.mrf.mxu0
    %v365 = vadd.f32 %v345, %v364
    %366 = vdwg.mxu0
    %367 = vmatpush.msra.mxu0 %v145
    %368 = vmatpush.msra.mxu0 %v144
    %369 = vmatpush.msra.mxu0 %v143
    %370 = vmatpush.msra.mxu0 %v142
    %371 = vmatpush.msra.mxu0 %v141
    %372 = vmatpush.msra.mxu0 %v140
    %373 = vmatpush.msra.mxu0 %v139
    %374 = vmatpush.msra.mxu0 %v138
    %375 = vmatpush.msra.mxu0 %v137
    %376 = vmatpush.msra.mxu0 %v136
    %377 = vmatpush.msra.mxu0 %v135
    %378 = vmatpush.msra.mxu0 %v134
    %379 = vmatpush.msra.mxu0 %v133
    %380 = vmatpush.msra.mxu0 %v132
    %381 = vmatpush.msra.mxu0 %v131
    %382 = vmatpush.msra.mxu0 %v130
    %383 = vmatmul.f32.gmra.mxu0 %v211
    %v384 = vpop.f32.mrf.mxu0
    %v385 = vadd.f32 %v365, %v384
    %386 = vdwg.mxu0
    %387 = vmatpush.msra.mxu0 %v161
    %388 = vmatpush.msra.mxu0 %v160
    %389 = vmatpush.msra.mxu0 %v159
    %390 = vmatpush.msra.mxu0 %v158
    %391 = vmatpush.msra.mxu0 %v157
    %392 = vmatpush.msra.mxu0 %v156
    %393 = vmatpush.msra.mxu0 %v155
    %394 = vmatpush.msra.mxu0 %v154
    %395 = vmatpush.msra.mxu0 %v153
    %396 = vmatpush.msra.mxu0 %v152
    %397 = vmatpush.msra.mxu0 %v151
    %398 = vmatpush.msra.mxu0 %v150
    %399 = vmatpush.msra.mxu0 %v149
    %400 = vmatpush.msra.mxu0 %v148
    %401 = vmatpush.msra.mxu0 %v147
    %402 = vmatpush.msra.mxu0 %v146
    %403 = vmatmul.f32.gmra.mxu0 %v213
    %v404 = vpop.f32.mrf.mxu0
    %v405 = vadd.f32 %v385, %v404
    %406 = vdwg.mxu0
    %407 = vmatpush.msra.mxu0 %v177
    %408 = vmatpush.msra.mxu0 %v176
    %409 = vmatpush.msra.mxu0 %v175
    %410 = vmatpush.msra.mxu0 %v174
    %411 = vmatpush.msra.mxu0 %v173
    %412 = vmatpush.msra.mxu0 %v172
    %413 = vmatpush.msra.mxu0 %v171
    %414 = vmatpush.msra.mxu0 %v170
    %415 = vmatpush.msra.mxu0 %v169
    %416 = vmatpush.msra.mxu0 %v168
    %417 = vmatpush.msra.mxu0 %v167
    %418 = vmatpush.msra.mxu0 %v166
    %419 = vmatpush.msra.mxu0 %v165
    %420 = vmatpush.msra.mxu0 %v164
    %421 = vmatpush.msra.mxu0 %v163
    %422 = vmatpush.msra.mxu0 %v162
    %423 = vmatmul.f32.gmra.mxu0 %v214
    %v424 = vpop.f32.mrf.mxu0
    %v425 = vadd.f32 %v405, %v424
    %426 = vdwg.mxu0
    %427 = vmatpush.msra.mxu0 %v193
    %428 = vmatpush.msra.mxu0 %v192
    %429 = vmatpush.msra.mxu0 %v191
    %430 = vmatpush.msra.mxu0 %v190
    %431 = vmatpush.msra.mxu0 %v189
    %432 = vmatpush.msra.mxu0 %v188
    %433 = vmatpush.msra.mxu0 %v187
    %434 = vmatpush.msra.mxu0 %v186
    %435 = vmatpush.msra.mxu0 %v185
    %436 = vmatpush.msra.mxu0 %v184
    %437 = vmatpush.msra.mxu0 %v183
    %438 = vmatpush.msra.mxu0 %v182
    %439 = vmatpush.msra.mxu0 %v181
    %440 = vmatpush.msra.mxu0 %v180
    %441 = vmatpush.msra.mxu0 %v179
    %442 = vmatpush.msra.mxu0 %v178
    %443 = vmatmul.f32.gmra.mxu0 %v215
    %v444 = vpop.f32.mrf.mxu0
    %v445 = vadd.f32 %v425, %v444
    %446 = vdwg.mxu0
    %vm447 = vcmask 1041408
    %v448 = vsel %vm447, %v445, -inf
    %449 = vmax.xlane.f32.xlu0 %v448
    %v450 = vpop.xlane.xlu0 %449
    %v451 = vsub.f32 %v445, %v450
    %v452 = vmul.f32 %v451, 1.442695
    %v453 = vpow.pop %v452
    %v454 = vsel %vm447, %v453, 0.0
    %455 = vadd.xlane.f32.xlu0 %v454
    %v456 = vpop.xlane.xlu0 %455
    %v457 = vlog2.pop %v456
    %v458 = vmul.f32 %v457, 0.6931472
    %v459 = vsub.f32 %v451, %v458
    %460 = vst [vmem:[#allocation2] sm:$0x3] %v459
    // Predicated region
    $region14: #{forward.3} parent=1 // pred_check
      _
    $region15: #{forward.3} parent=1 // pred_check_branch
      %462 = sbr.rel (0) target = $region17
    $region16: #{forward.3} parent=1 // pred_region
      %464 = vsyncadd [#allocation3], 0
      %s466 = sshll.u32 [#allocation2], 4
      %s467 = int_to_ptr.vmem [resolvable:$true] %s466
      %s468 = sshll.u32 %s3, 4
      %s469 = int_to_ptr.hbm [resolvable:$true] %s468
      %471 = dma.vmem_to_hbm [thread:$0]  %s467, 32, %s469, [#allocation3]
    $region17: #{forward.3} parent=1 // pred_fallthru
      _
    // Predicated region
    $region18: #{forward.3} parent=1 // pred_check
      _
    $region19: #{forward.3} parent=1 // pred_check_branch
      %473 = sbr.rel (0) target = $region21
    $region20: #{forward.3} parent=1 // pred_region
      %475 = dma.done [#allocation3], 32
    $region21: #{forward.3} parent=1 // pred_fallthru
      _
    %476 = vsyncpa [#allocation3], 1

// kernel: forward.2
$region0: #{forward.2}
  #allocation0 [shape = 'u32[]', space=smem, size = 0x4, offset = 0x4, fixed_abs, tag = 'smem constant byte address 0x4 - core index']
  #allocation1 [shape = 'u32[72,128]{1,0:T(1,128)}', space=vmem, size = 0x9000, scoped, tag = 'internal scratch']
  %s0 = inlined_call_operand.vmem [shape: bf16[2,256,27], index: 0, kind: input, shape index: {}]
  %s1 = inlined_call_operand.vmem [shape: bf16[27,32], index: 1, kind: input, shape index: {}]
  %s2 = inlined_call_operand.vmem [shape: f32[1,32], index: 2, kind: input, shape index: {}]
  %s3 = inlined_call_operand.vmem [shape: bf16[32,1408], index: 3, kind: input, shape index: {}]
  %s4 = inlined_call_operand.vmem [shape: f32[1,1408], index: 4, kind: input, shape index: {}]
  %s5 = inlined_call_operand.vmem [shape: f32[2,11,1,128], index: 5, kind: output, shape index: {}]
  %s6 = sld [smem:[#allocation0]]
  $region102: #{forward.2} parent=0
    _
  %s8 = ssub.s32 1, %s6
  %s9 = scalar_select 0, %s8, %s6
  $region1: #{forward.2} parent=0
    #allocation2 [shape = 'u8[16384]{0}', space=vmem, size = 0x4000, scoped, tag = 'input window, operand 3']
    loop: start=0, step=1, limit=24
    $region2: #{forward.2} parent=1 // loop_pre_header
      _
    $region3: #{forward.2} parent=1 // loop_header
      %s11 = sphi 0, %s15
      %p12 = scmp.ge.s32.totalorder %s11, 24
      %s18 = sphi 0, %s37
      %s19 = sphi 0, %s33
      %s20 = sphi 0, %s29
      %s21 = sphi 0, %s18
      %s22 = sphi 0, %s19
      %s23 = sphi 0, %s20
      %s24 = sphi 0, %s21
      %s25 = sphi 0, %s22
      %s26 = sphi 0, %s23
      %s42 = sphi 0, %s44
      %s45 = sphi 0, %s42
      %s46 = sphi 0, %s45
      %s62 = sphi 0, %s46
      %s66 = sphi 0, %s66
      %s68 = sphi 0, %s66
      %s69 = sphi 0, %s68
      %s83 = sphi 0, %s69
      %s87 = sphi 0, %s87
      %s89 = sphi 0, %s87
      %s90 = sphi 0, %s89
      %s104 = sphi 0, %s90
      %s110 = sphi 0, %s112
      %s113 = sphi 0, %s110
      %s114 = sphi 0, %s113
      %s130 = sphi 0, %s114
      %s136 = sphi 0, %s138
      %s139 = sphi 0, %s136
      %s140 = sphi 0, %s139
      %s156 = sphi 0, %s140
      %s164 = sphi 0, %s166
      %s167 = sphi 0, %s164
      %s168 = sphi 0, %s167
      %s184 = sphi 0, %s168
    $region4: #{forward.2} parent=1 // loop_header_branch
      %14 = sbr.rel (%p12) target = $region8
    $region5: #{forward.2} parent=1 // loop_body
      %s16 = ssub.s32 %s11, 1
      %s17 = ssub.s32 %s11, 2
      %s27 = sadd.s32 1, %s20
      %p28 = scmp.ge.s32.totalorder %s27, 1
      %s29 = scalar_select %p28, 0, %s27
      %s30 = sadd.s32 1, %s19
      %s31 = scalar_select %p28, %s30, %s19
      %p32 = scmp.ge.s32.totalorder %s31, 11
      %s33 = scalar_select %p32, 0, %s31
      %s34 = sadd.s32 1, %s18
      %s35 = scalar_select %p32, %s34, %s18
      %p36 = scmp.ge.s32.totalorder %s35, 2
      %s37 = scalar_select %p36, 0, %s35
      %s38 = ssub.s32 %s18, %s37
      %s39 = ssub.s32 %s20, %s29
      %s40 = sor.u32 %s38, %s39
      %p41 = scmp.eq.s32.totalorder %s40, 0
      %s43 = sadd.s32 %s42, 1
      %s44 = scalar_select %p41, %s42, %s43
      %p47 = pneg %p41
      %p48 = scmp.eq.s32.totalorder %s11, 21
      %p49 = por %p47, %p48
      %p50 = scmp.ne.s32.totalorder %s42, %s45
      %p51 = scmp.eq.s32.totalorder %s11, 0
      %p52 = por %p50, %p51
      %p53 = scmp.ne.s32.totalorder %s42, %s45
      %p54 = scmp.eq.s32.totalorder %s16, 21
      %p55 = por %p53, %p54
      %p56 = scmp.ne.s32.totalorder %s45, %s46
      %p57 = scmp.eq.s32.totalorder %s16, 0
      %p58 = por %p56, %p57
      %p59 = scmp.ne.s32.totalorder %s45, %s46
      %p60 = scmp.eq.s32.totalorder %s17, 21
      %p61 = por %p59, %p60
      %p63 = scmp.ne.s32.totalorder %s46, %s62
      %p64 = scmp.eq.s32.totalorder %s17, 0
      %p65 = por %p63, %p64
      %s67 = sadd.s32 %s66, 1
      %p70 = scmp.eq.s32.totalorder %s11, 21
      %p71 = scmp.ne.s32.totalorder %s66, %s68
      %p72 = scmp.eq.s32.totalorder %s11, 0
      %p73 = por %p71, %p72
      %p74 = scmp.ne.s32.totalorder %s66, %s68
      %p75 = scmp.eq.s32.totalorder %s16, 21
      %p76 = por %p74, %p75
      %p77 = scmp.ne.s32.totalorder %s68, %s69
      %p78 = scmp.eq.s32.totalorder %s16, 0
      %p79 = por %p77, %p78
      %p80 = scmp.ne.s32.totalorder %s68, %s69
      %p81 = scmp.eq.s32.totalorder %s17, 21
      %p82 = por %p80, %p81
      %p84 = scmp.ne.s32.totalorder %s69, %s83
      %p85 = scmp.eq.s32.totalorder %s17, 0
      %p86 = por %p84, %p85
      %s88 = sadd.s32 %s87, 1
      %p91 = scmp.eq.s32.totalorder %s11, 21
      %p92 = scmp.ne.s32.totalorder %s87, %s89
      %p93 = scmp.eq.s32.totalorder %s11, 0
      %p94 = por %p92, %p93
      %p95 = scmp.ne.s32.totalorder %s87, %s89
      %p96 = scmp.eq.s32.totalorder %s16, 21
      %p97 = por %p95, %p96
      %p98 = scmp.ne.s32.totalorder %s89, %s90
      %p99 = scmp.eq.s32.totalorder %s16, 0
      %p100 = por %p98, %p99
      %p101 = scmp.ne.s32.totalorder %s89, %s90
      %p102 = scmp.eq.s32.totalorder %s17, 21
      %p103 = por %p101, %p102
      %p105 = scmp.ne.s32.totalorder %s90, %s104
      %p106 = scmp.eq.s32.totalorder %s17, 0
      %p107 = por %p105, %p106
      %s108 = ssub.s32 %s19, %s33
      %p109 = scmp.eq.s32.totalorder %s108, 0
      %s111 = sadd.s32 %s110, 1
      %s112 = scalar_select %p109, %s110, %s111
      %p115 = pneg %p109
      %p116 = scmp.eq.s32.totalorder %s11, 21
      %p117 = por %p115, %p116
      %p118 = scmp.ne.s32.totalorder %s110, %s113
      %p119 = scmp.eq.s32.totalorder %s11, 0
      %p120 = por %p118, %p119
      %p121 = scmp.ne.s32.totalorder %s110, %s113
      %p122 = scmp.eq.s32.totalorder %s16, 21
      %p123 = por %p121, %p122
      %p124 = scmp.ne.s32.totalorder %s113, %s114
      %p125 = scmp.eq.s32.totalorder %s16, 0
      %p126 = por %p124, %p125
      %p127 = scmp.ne.s32.totalorder %s113, %s114
      %p128 = scmp.eq.s32.totalorder %s17, 21
      %p129 = por %p127, %p128
      %p131 = scmp.ne.s32.totalorder %s114, %s130
      %p132 = scmp.eq.s32.totalorder %s17, 0
      %p133 = por %p131, %p132
      %s134 = ssub.s32 %s19, %s33
      %p135 = scmp.eq.s32.totalorder %s134, 0
      %s137 = sadd.s32 %s136, 1
      %s138 = scalar_select %p135, %s136, %s137
      %p141 = pneg %p135
      %p142 = scmp.eq.s32.totalorder %s11, 21
      %p143 = por %p141, %p142
      %p144 = scmp.ne.s32.totalorder %s136, %s139
      %p145 = scmp.eq.s32.totalorder %s11, 0
      %p146 = por %p144, %p145
      %p147 = scmp.ne.s32.totalorder %s136, %s139
      %p148 = scmp.eq.s32.totalorder %s16, 21
      %p149 = por %p147, %p148
      %p150 = scmp.ne.s32.totalorder %s139, %s140
      %p151 = scmp.eq.s32.totalorder %s16, 0
      %p152 = por %p150, %p151
      %p153 = scmp.ne.s32.totalorder %s139, %s140
      %p154 = scmp.eq.s32.totalorder %s17, 21
      %p155 = por %p153, %p154
      %p157 = scmp.ne.s32.totalorder %s140, %s156
      %p158 = scmp.eq.s32.totalorder %s17, 0
      %p159 = por %p157, %p158
      %s160 = ssub.s32 %s18, %s37
      %s161 = ssub.s32 %s19, %s33
      %s162 = sor.u32 %s160, %s161
      %p163 = scmp.eq.s32.totalorder %s162, 0
      %s165 = sadd.s32 %s164, 1
      %s166 = scalar_select %p163, %s164, %s165
      %p169 = pneg %p163
      %p170 = scmp.eq.s32.totalorder %s11, 21
      %p171 = por %p169, %p170
      %p172 = scmp.ne.s32.totalorder %s164, %s167
      %p173 = scmp.eq.s32.totalorder %s11, 0
      %p174 = por %p172, %p173
      %p175 = scmp.ne.s32.totalorder %s164, %s167
      %p176 = scmp.eq.s32.totalorder %s16, 21
      %p177 = por %p175, %p176
      %p178 = scmp.ne.s32.totalorder %s167, %s168
      %p179 = scmp.eq.s32.totalorder %s16, 0
      %p180 = por %p178, %p179
      %p181 = scmp.ne.s32.totalorder %s167, %s168
      %p182 = scmp.eq.s32.totalorder %s17, 21
      %p183 = por %p181, %p182
      %p185 = scmp.ne.s32.totalorder %s168, %s184
      %p186 = scmp.eq.s32.totalorder %s17, 0
      %p187 = por %p185, %p186
      %p188 = scmp.le.s32.totalorder 1, %s11
      %p189 = scmp.lt.s32.totalorder %s11, 23
      %p190 = pnand %p188, %p189
      %p191 = pneg %p190
      // Predicated region
      $region9: #{forward.2} parent=5 // pred_check
        _
      $region10: #{forward.2} parent=5 // pred_check_branch
        %193 = sbr.rel (%p190) target = $region12
      $region11: #{forward.2} parent=5 // pred_region
        %s194 = ssub.s32 %s11, 1
        // Predicated region
        $region13: #{forward.2} parent=11 // pred_check
          %p195 = pneg %p79
        $region14: #{forward.2} parent=11 // pred_check_branch
          %197 = sbr.rel (%p195) target = $region16
        $region15: #{forward.2} parent=11 // pred_region
          _
        $region16: #{forward.2} parent=11 // pred_fallthru
          _
        // Predicated region
        $region17: #{forward.2} parent=11 // pred_check
          %p198 = pneg %p100
        $region18: #{forward.2} parent=11 // pred_check_branch
          %200 = sbr.rel (%p198) target = $region20
        $region19: #{forward.2} parent=11 // pred_region
          _
        $region20: #{forward.2} parent=11 // pred_fallthru
          _
      $region12: #{forward.2} parent=5 // pred_fallthru
        _
      %p201 = scmp.lt.s32.totalorder %s11, 22
      // Predicated region
      $region21: #{forward.2} parent=5 // pred_check
        %p202 = pneg %p201
      $region22: #{forward.2} parent=5 // pred_check_branch
        %204 = sbr.rel (%p202) target = $region24
      $region23: #{forward.2} parent=5 // pred_region
        // Predicated region
        $region25: #{forward.2} parent=23 // pred_check
          %p205 = pneg %p52
        $region26: #{forward.2} parent=23 // pred_check_branch
          %207 = sbr.rel (%p205) target = $region28
        $region27: #{forward.2} parent=23 // pred_region
          %s208 = smul.u32 32, %s20
          %p209 = scmp.lt.s32.totalorder %s18, 1
          %s210 = scalar_select %p209, %s18, 1
          %p211 = scmp.lt.s32.totalorder %s208, 31
          %s212 = scalar_select %p211, %s208, 31
          %s213 = smul.addr %s210, 32
          %s214 = sadd.s32 %s212, %s213
          %s215 = smul.addr %s214, 4
          %s216 = scalar_lea.vmem %s0, %s215
          %s217 = smul.u32 32, %s20
        $region28: #{forward.2} parent=23 // pred_fallthru
          _
        // Predicated region
        $region29: #{forward.2} parent=23 // pred_check
          %p218 = pneg %p120
        $region30: #{forward.2} parent=23 // pred_check_branch
          %220 = sbr.rel (%p218) target = $region32
        $region31: #{forward.2} parent=23 // pred_region
          %s221 = sand.u32 %s110, 1
          %s222 = sand.u32 %s110, 1
          %s223 = smul.addr %s222, 16
          %s224 = scalar_lea.vmem [#allocation2], %s223
          %s225 = smul.addr %s19, 4
          %s226 = scalar_lea.vmem %s3, %s225
          // Predicated region
          $region33: #{forward.2} parent=31 // pred_check
            _
          $region34: #{forward.2} parent=31 // pred_check_branch
            %228 = sbr.rel (0) target = $region36
          $region35: #{forward.2} parent=31 // pred_region
            // Predicated region
            $region37: #{forward.2} parent=35 // pred_check
              _
            $region38: #{forward.2} parent=35 // pred_check_branch
              %230 = sbr.rel target = $region40
            $region39: #{forward.2} parent=35 // pred_region
              // Predicated region
              $region52: #{forward.2} parent=39 // pred_check
                _
              $region53: #{forward.2} parent=39 // pred_check_branch
                %252 = sbr.rel (0) target = $region55
              $region54: #{forward.2} parent=39 // pred_region
                loop: start=0, step=1, limit=1
                $region56: #{forward.2} parent=54 // loop_pre_header
                  _
                $region57: #{forward.2} parent=54 // loop_header
                  %s254 = sphi 0, %s258
                  %p255 = scmp.ge.s32.totalorder %s254, 1
                  %s259 = sphi %s226, %s226
                  %s260 = sphi %s224, %s224
                $region58: #{forward.2} parent=54 // loop_header_branch
                  %257 = sbr.rel (%p255) target = $region62
                $region59: #{forward.2} parent=54 // loop_body
                  _
                $region60: #{forward.2} parent=54 // loop_footer
                  %s258 = sadd.s32 1, %s254
                $region61: #{forward.2} parent=54 // loop_footer_branch
                  %253 = sbr.rel target = $region57
                $region62: #{forward.2} parent=54 // loop_exit
                  _
                %s262 = ssub.s32 16, 1
                loop: start=0, step=1, limit=1
                $region63: #{forward.2} parent=54 // loop_pre_header
                  _
                $region64: #{forward.2} parent=54 // loop_header
                  %s264 = sphi 0, %s268
                  %p265 = scmp.ge.s32.totalorder %s264, 1
                  %s269 = sphi %s226, %s226
                  %s270 = sphi %s224, %s224
                $region65: #{forward.2} parent=54 // loop_header_branch
                  %267 = sbr.rel (%p265) target = $region69
                $region66: #{forward.2} parent=54 // loop_body
                  %v271 = vld [vmem:[%s269] sm:%s262]
                  %272 = vst [vmem:[%s270] sm:%s262] %v271
                  %v273 = vld [vmem:[%s269 + $0x2c] sm:%s262]
                  %274 = vst [vmem:[%s270 + $0x4] sm:%s262] %v273
                  %v275 = vld [vmem:[%s269 + $0x58] sm:%s262]
                  %276 = vst [vmem:[%s270 + $0x8] sm:%s262] %v275
                  %v277 = vld [vmem:[%s269 + $0x84] sm:%s262]
                  %278 = vst [vmem:[%s270 + $0xc] sm:%s262] %v277
                $region67: #{forward.2} parent=54 // loop_footer
                  %s268 = sadd.s32 1, %s264
                $region68: #{forward.2} parent=54 // loop_footer_branch
                  %263 = sbr.rel target = $region64
                $region69: #{forward.2} parent=54 // loop_exit
                  _
              $region55: #{forward.2} parent=39 // pred_fallthru
                _
            $region40: #{forward.2} parent=35 // pred_fallthru
              _
            // Predicated region
            $region41: #{forward.2} parent=35 // pred_check
              _
            $region42: #{forward.2} parent=35 // pred_check_branch
              %232 = sbr.rel (0) target = $region44
            $region43: #{forward.2} parent=35 // pred_region
              %s234 = ssub.s32 16, 1
              loop: start=0, step=1, limit=1
              $region45: #{forward.2} parent=43 // loop_pre_header
                _
              $region46: #{forward.2} parent=43 // loop_header
                %s236 = sphi 0, %s240
                %p237 = scmp.ge.s32.totalorder %s236, 1
                %s241 = sphi %s226, %s226
                %s242 = sphi %s224, %s224
              $region47: #{forward.2} parent=43 // loop_header_branch
                %239 = sbr.rel (%p237) target = $region51
              $region48: #{forward.2} parent=43 // loop_body
                %v243 = vld [vmem:[%s241] sm:%s234]
                %244 = vst [vmem:[%s242] sm:%s234] %v243
                %v245 = vld [vmem:[%s241 + $0x2c] sm:%s234]
                %246 = vst [vmem:[%s242 + $0x4] sm:%s234] %v245
                %v247 = vld [vmem:[%s241 + $0x58] sm:%s234]
                %248 = vst [vmem:[%s242 + $0x8] sm:%s234] %v247
                %v249 = vld [vmem:[%s241 + $0x84] sm:%s234]
                %250 = vst [vmem:[%s242 + $0xc] sm:%s234] %v249
              $region49: #{forward.2} parent=43 // loop_footer
                %s240 = sadd.s32 1, %s236
              $region50: #{forward.2} parent=43 // loop_footer_branch
                %235 = sbr.rel target = $region46
              $region51: #{forward.2} parent=43 // loop_exit
                _
            $region44: #{forward.2} parent=35 // pred_fallthru
              _
          $region36: #{forward.2} parent=31 // pred_fallthru
            _
          %279 = vnop
        $region32: #{forward.2} parent=23 // pred_fallthru
          _
        // Predicated region
        $region70: #{forward.2} parent=23 // pred_check
          %p280 = pneg %p146
        $region71: #{forward.2} parent=23 // pred_check_branch
          %282 = sbr.rel (%p280) target = $region73
        $region72: #{forward.2} parent=23 // pred_region
          %p283 = scmp.lt.s32.totalorder %s19, 10
          %s284 = scalar_select %p283, %s19, 10
          %s285 = scalar_lea.vmem %s4, %s284
        $region73: #{forward.2} parent=23 // pred_fallthru
          _
      $region24: #{forward.2} parent=5 // pred_fallthru
        _
      %p286 = scmp.le.s32.totalorder 1, %s11
      %p287 = scmp.lt.s32.totalorder %s11, 23
      %p288 = pnand %p286, %p287
      %p289 = pneg %p288
      // Predicated region
      $region74: #{forward.2} parent=5 // pred_check
        _
      $region75: #{forward.2} parent=5 // pred_check_branch
        %291 = sbr.rel (%p288) target = $region77
      $region76: #{forward.2} parent=5 // pred_region
        %s292 = ssub.s32 %s11, 1
        %s293 = sand.u32 %s113, 1
        %s294 = sand.u32 %s113, 1
        %s295 = smul.addr %s294, 16
        %s296 = scalar_lea.vmem [#allocation2], %s295
        // Predicated region
        $region78: #{forward.2} parent=76 // pred_check
          %p297 = pneg %p126
        $region79: #{forward.2} parent=76 // pred_check_branch
          %299 = sbr.rel (%p297) target = $region81
        $region80: #{forward.2} parent=76 // pred_region
          _
        $region81: #{forward.2} parent=76 // pred_fallthru
          _
        %s300 = smul.u32 32, %s23
        %p301 = scmp.lt.s32.totalorder %s21, 1
        %s302 = scalar_select %p301, %s21, 1
        %p303 = scmp.lt.s32.totalorder %s300, 31
        %s304 = scalar_select %p303, %s300, 31
        %s305 = smul.addr %s302, 32
        %s306 = sadd.s32 %s304, %s305
        %s307 = smul.addr %s306, 4
        %s308 = scalar_lea.vmem %s0, %s307
        %p309 = pneg %p58
        %p310 = pneg %p55
        %p311 = pneg %p79
        %p312 = pneg %p76
        %p313 = pneg %p100
        %p314 = pneg %p97
        %s315 = sand.u32 %s113, 1
        %s316 = sand.u32 %s113, 1
        %s317 = smul.addr %s316, 16
        %s318 = scalar_lea.vmem [#allocation2], %s317
        %p319 = pneg %p126
        %p320 = pneg %p123
        %p321 = scmp.lt.s32.totalorder %s22, 10
        %s322 = scalar_select %p321, %s22, 10
        %s323 = scalar_lea.vmem %s4, %s322
        %p324 = pneg %p152
        %p325 = pneg %p149
        %p326 = pneg %p180
        %p327 = pneg %p177
        %p328 = scmp.lt.s32.totalorder %s21, 1
        %s329 = scalar_select %p328, %s21, 1
        %p330 = scmp.lt.s32.totalorder %s22, 10
        %s331 = scalar_select %p330, %s22, 10
        %s332 = smul.addr %s329, 11
        %s333 = sadd.s32 %s331, %s332
        %s334 = scalar_lea.vmem %s5, %s333
        %s335 = smul.u32 32, %s23
        %p336 = scmp.lt.s32.totalorder %s21, 1
        %s337 = scalar_select %p336, %s21, 1
        %p338 = scmp.lt.s32.totalorder %s335, 31
        %s339 = scalar_select %p338, %s335, 31
        %s340 = smul.addr %s337, 32
        %s341 = sadd.s32 %s339, %s340
        %s342 = smul.addr %s341, 4
        %s343 = scalar_lea.vmem %s0, %s342
        %s344 = smul.u32 32, %s23
        %p345 = scmp.lt.s32.totalorder %s22, 10
        %s346 = scalar_select %p345, %s22, 10
        %s347 = scalar_lea.vmem %s4, %s346
        %p348 = scmp.lt.s32.totalorder %s21, 1
        %s349 = scalar_select %p348, %s21, 1
        %p350 = scmp.lt.s32.totalorder %s22, 10
        %s351 = scalar_select %p350, %s22, 10
        %s352 = smul.addr %s349, 11
        %s353 = sadd.s32 %s351, %s352
        %s354 = scalar_lea.vmem %s5, %s353
        %v356 = vld [vmem:[%s343] sm:$0xf]
        %v357 = vld [vmem:[%s343 + $0x4] sm:$0xf]
        %v358 = vld [vmem:[%s343 + $0x8] sm:$0xf]
        %v359 = vld [vmem:[%s343 + $0xc] sm:$0xf]
        %v360 = vld [vmem:[%s343 + $0x10] sm:$0xf]
        %v361 = vld [vmem:[%s343 + $0x14] sm:$0xf]
        %v362 = vld [vmem:[%s343 + $0x18] sm:$0xf]
        %v363 = vld [vmem:[%s343 + $0x1c] sm:$0xf]
        %v364 = vld [vmem:[%s343 + $0x20] sm:$0xf]
        %v365 = vld [vmem:[%s343 + $0x24] sm:$0xf]
        %v366 = vld [vmem:[%s343 + $0x28] sm:$0xf]
        %v367 = vld [vmem:[%s343 + $0x2c] sm:$0xf]
        %v368 = vld [vmem:[%s343 + $0x30] sm:$0xf]
        %v369 = vld [vmem:[%s343 + $0x34] sm:$0xf]
        %v370 = vld [vmem:[%s343 + $0x38] sm:$0xf]
        %v371 = vld [vmem:[%s343 + $0x3c] sm:$0xf]
        %v372 = vld [vmem:[%s343 + $0x40] sm:$0xf]
        %v373 = vld [vmem:[%s343 + $0x44] sm:$0xf]
        %v374 = vld [vmem:[%s343 + $0x48] sm:$0xf]
        %v375 = vld [vmem:[%s343 + $0x4c] sm:$0xf]
        %v376 = vld [vmem:[%s343 + $0x50] sm:$0xf]
        %v377 = vld [vmem:[%s343 + $0x54] sm:$0xf]
        %v378 = vld [vmem:[%s343 + $0x58] sm:$0xf]
        %v379 = vld [vmem:[%s343 + $0x5c] sm:$0xf]
        %v380 = vld [vmem:[%s343 + $0x60] sm:$0xf]
        %v381 = vld [vmem:[%s343 + $0x64] sm:$0xf]
        %v382 = vld [vmem:[%s343 + $0x68] sm:$0xf]
        %v383 = vld [vmem:[%s343 + $0x6c] sm:$0xf]
        %v384 = vld [vmem:[%s343 + $0x70] sm:$0xf]
        %v385 = vld [vmem:[%s343 + $0x74] sm:$0xf]
        %v386 = vld [vmem:[%s343 + $0x78] sm:$0xf]
        %v387 = vld [vmem:[%s343 + $0x7c] sm:$0xf]
        %v388 = vld [vmem:[%s1] sm:$0xf]
        %v389 = vld [vmem:[%s1 + $0x4] sm:$0xf]
        %v390 = vld [vmem:[%s1 + $0x8] sm:$0xf]
        %v391 = vld [vmem:[%s1 + $0xc] sm:$0x3]
        %v392 = vld [vmem:[%s2] sm:$0x1]
        %v394 = vperm.slane %v392, 0
        %v428 = vunpack.c.l.b16 %v356
        %v429 = vunpack.c.l.b16 %v357
        %v430 = vunpack.c.l.b16 %v358
        %v431 = vunpack.c.l.b16 %v359
        %v432 = vunpack.c.l.b16 %v360
        %v433 = vunpack.c.l.b16 %v361
        %v434 = vunpack.c.l.b16 %v362
        %v435 = vunpack.c.l.b16 %v363
        %v436 = vunpack.c.l.b16 %v364
        %v437 = vunpack.c.l.b16 %v365
        %v438 = vunpack.c.l.b16 %v366
        %v439 = vunpack.c.l.b16 %v367
        %v440 = vunpack.c.l.b16 %v368
        %v441 = vunpack.c.l.b16 %v369
        %v442 = vunpack.c.l.b16 %v370
        %v443 = vunpack.c.l.b16 %v371
        %v444 = vunpack.c.l.b16 %v372
        %v445 = vunpack.c.l.b16 %v373
        %v446 = vunpack.c.l.b16 %v374
        %v447 = vunpack.c.l.b16 %v375
        %v448 = vunpack.c.l.b16 %v376
        %v449 = vunpack.c.l.b16 %v377
        %v450 = vunpack.c.l.b16 %v378
        %v451 = vunpack.c.l.b16 %v379
        %v452 = vunpack.c.l.b16 %v380
        %v453 = vunpack.c.l.b16 %v381
        %v454 = vunpack.c.l.b16 %v382
        %v455 = vunpack.c.l.b16 %v383
        %v456 = vunpack.c.l.b16 %v384
        %v457 = vunpack.c.l.b16 %v385
        %v458 = vunpack.c.l.b16 %v386
        %v459 = vunpack.c.l.b16 %v387
        %v460 = vpack.c.b16 %v429, %v428
        %v461 = vpack.c.b16 %v431, %v430
        %v462 = vpack.c.b16 %v433, %v432
        %v463 = vpack.c.b16 %v435, %v434
        %v464 = vpack.c.b16 %v437, %v436
        %v465 = vpack.c.b16 %v439, %v438
        %v466 = vpack.c.b16 %v441, %v440
        %v467 = vpack.c.b16 %v443, %v442
        %v468 = vpack.c.b16 %v445, %v444
        %v469 = vpack.c.b16 %v447, %v446
        %v470 = vpack.c.b16 %v449, %v448
        %v471 = vpack.c.b16 %v451, %v450
        %v472 = vpack.c.b16 %v453, %v452
        %v473 = vpack.c.b16 %v455, %v454
        %v474 = vpack.c.b16 %v457, %v456
        %v475 = vpack.c.b16 %v459, %v458
        %v480 = vunpack.c.l.b16 %v388
        %v481 = vunpack.c.l.b16 %v389
        %v482 = vunpack.c.l.b16 %v390
        %v483 = vunpack.c.l.b16 %v391
        %v484 = vpack.c.b16 %v481, %v480
        %v485 = vpack.c.b16 %v483, %v482
        %vm487 = vcmask 220160
        %v489 = vsel %vm487, %v460, 0
        %v492 = vsel %vm487, %v461, 0
        %v495 = vsel %vm487, %v462, 0
        %v498 = vsel %vm487, %v463, 0
        %v501 = vsel %vm487, %v464, 0
        %v504 = vsel %vm487, %v465, 0
        %v507 = vsel %vm487, %v466, 0
        %v510 = vsel %vm487, %v467, 0
        %v513 = vsel %vm487, %v468, 0
        %v516 = vsel %vm487, %v469, 0
        %v519 = vsel %vm487, %v470, 0
        %v522 = vsel %vm487, %v471, 0
        %v525 = vsel %vm487, %v472, 0
        %v528 = vsel %vm487, %v473, 0
        %v531 = vsel %vm487, %v474, 0
        %v534 = vsel %vm487, %v475, 0
        %vm536 = vcmask 1044480
        %vm537 = vcmask 1045504
        %v538 = vsel %vm536, 4294967295, 65535
        %v539 = vsel %vm537, %v538, 0
        %v541 = vand.u32 %v485, %v539
        %543 = vmatpush.bf16.msra.mxu0 0
        %544 = vmatpush.bf16.msra.mxu0 0
        %545 = vmatpush.bf16.msra.mxu0 0
        %546 = vmatpush.bf16.msra.mxu0 0
        %547 = vmatpush.bf16.msra.mxu0 0
        %548 = vmatpush.bf16.msra.mxu0 0
        %549 = vmatpush.bf16.msra.mxu0 %v541
        %550 = vmatpush.bf16.msra.mxu0 %v484
        %551 = vmatmul.bf16.gmra.mxu0 %v489
        %v552 = vpop.f32.mrf.mxu0
        %v553 = vadd.f32 %v394, %v552
        %v554 = vpop.f32.mrf.mxu0
        %v555 = vadd.f32 %v394, %v554
        %556 = vmatmul.bf16.gmra.mxu0 %v492
        %v557 = vpop.f32.mrf.mxu0
        %v558 = vadd.f32 %v394, %v557
        %v559 = vpop.f32.mrf.mxu0
        %v560 = vadd.f32 %v394, %v559
        %561 = vmatmul.bf16.gmra.mxu0 %v495
        %v562 = vpop.f32.mrf.mxu0
        %v563 = vadd.f32 %v394, %v562
        %v564 = vpop.f32.mrf.mxu0
        %v565 = vadd.f32 %v394, %v564
        %566 = vmatmul.bf16.gmra.mxu0 %v498
        %v567 = vpop.f32.mrf.mxu0
        %v568 = vadd.f32 %v394, %v567
        %v569 = vpop.f32.mrf.mxu0
        %v570 = vadd.f32 %v394, %v569
        %571 = vmatmul.bf16.gmra.mxu0 %v501
        %v572 = vpop.f32.mrf.mxu0
        %v573 = vadd.f32 %v394, %v572
        %v574 = vpop.f32.mrf.mxu0
        %v575 = vadd.f32 %v394, %v574
        %576 = vmatmul.bf16.gmra.mxu0 %v504
        %v577 = vpop.f32.mrf.mxu0
        %v578 = vadd.f32 %v394, %v577
        %v579 = vpop.f32.mrf.mxu0
        %v580 = vadd.f32 %v394, %v579
        %581 = vmatmul.bf16.gmra.mxu0 %v507
        %v582 = vpop.f32.mrf.mxu0
        %v583 = vadd.f32 %v394, %v582
        %v584 = vpop.f32.mrf.mxu0
        %v585 = vadd.f32 %v394, %v584
        %586 = vmatmul.bf16.gmra.mxu0 %v510
        %v587 = vpop.f32.mrf.mxu0
        %v588 = vadd.f32 %v394, %v587
        %v589 = vpop.f32.mrf.mxu0
        %v590 = vadd.f32 %v394, %v589
        %591 = vmatmul.bf16.gmra.mxu0 %v513
        %v592 = vpop.f32.mrf.mxu0
        %v593 = vadd.f32 %v394, %v592
        %v594 = vpop.f32.mrf.mxu0
        %v595 = vadd.f32 %v394, %v594
        %596 = vmatmul.bf16.gmra.mxu0 %v516
        %v597 = vpop.f32.mrf.mxu0
        %v598 = vadd.f32 %v394, %v597
        %v599 = vpop.f32.mrf.mxu0
        %v600 = vadd.f32 %v394, %v599
        %601 = vmatmul.bf16.gmra.mxu0 %v519
        %v602 = vpop.f32.mrf.mxu0
        %v603 = vadd.f32 %v394, %v602
        %v604 = vpop.f32.mrf.mxu0
        %v605 = vadd.f32 %v394, %v604
        %606 = vmatmul.bf16.gmra.mxu0 %v522
        %v607 = vpop.f32.mrf.mxu0
        %v608 = vadd.f32 %v394, %v607
        %v609 = vpop.f32.mrf.mxu0
        %v610 = vadd.f32 %v394, %v609
        %611 = vmatmul.bf16.gmra.mxu0 %v525
        %v612 = vpop.f32.mrf.mxu0
        %v613 = vadd.f32 %v394, %v612
        %v614 = vpop.f32.mrf.mxu0
        %v615 = vadd.f32 %v394, %v614
        %616 = vmatmul.bf16.gmra.mxu0 %v528
        %v617 = vpop.f32.mrf.mxu0
        %v618 = vadd.f32 %v394, %v617
        %v619 = vpop.f32.mrf.mxu0
        %v620 = vadd.f32 %v394, %v619
        %621 = vmatmul.bf16.gmra.mxu0 %v531
        %v622 = vpop.f32.mrf.mxu0
        %v623 = vadd.f32 %v394, %v622
        %v624 = vpop.f32.mrf.mxu0
        %v625 = vadd.f32 %v394, %v624
        %626 = vmatmul.bf16.gmra.mxu0 %v534
        %v627 = vpop.f32.mrf.mxu0
        %v628 = vadd.f32 %v394, %v627
        %v629 = vpop.f32.mrf.mxu0
        %v630 = vadd.f32 %v394, %v629
        %631 = vdwg.mxu0
        %v632 = vxor.u32 %v553, 2147483648
        %v633 = vxor.u32 %v555, 2147483648
        %v634 = vxor.u32 %v558, 2147483648
        %v635 = vxor.u32 %v560, 2147483648
        %v636 = vxor.u32 %v563, 2147483648
        %v637 = vxor.u32 %v565, 2147483648
        %v638 = vxor.u32 %v568, 2147483648
        %v639 = vxor.u32 %v570, 2147483648
        %v640 = vxor.u32 %v573, 2147483648
        %v641 = vxor.u32 %v575, 2147483648
        %v642 = vxor.u32 %v578, 2147483648
        %v643 = vxor.u32 %v580, 2147483648
        %v644 = vxor.u32 %v583, 2147483648
        %v645 = vxor.u32 %v585, 2147483648
        %v646 = vxor.u32 %v588, 2147483648
        %v647 = vxor.u32 %v590, 2147483648
        %v648 = vxor.u32 %v593, 2147483648
        %v649 = vxor.u32 %v595, 2147483648
        %v650 = vxor.u32 %v598, 2147483648
        %v651 = vxor.u32 %v600, 2147483648
        %v652 = vxor.u32 %v603, 2147483648
        %v653 = vxor.u32 %v605, 2147483648
        %v654 = vxor.u32 %v608, 2147483648
        %v655 = vxor.u32 %v610, 2147483648
        %v656 = vxor.u32 %v613, 2147483648
        %v657 = vxor.u32 %v615, 2147483648
        %v658 = vxor.u32 %v618, 2147483648
        %v659 = vxor.u32 %v620, 2147483648
        %v660 = vxor.u32 %v623, 2147483648
        %v661 = vxor.u32 %v625, 2147483648
        %v662 = vxor.u32 %v628, 2147483648
        %v663 = vxor.u32 %v630, 2147483648
        %v664 = vmul.f32 %v632, 1.442695
        %v665 = vpow.pop %v664
        %v666 = vmul.f32 %v633, 1.442695
        %v667 = vpow.pop %v666
        %v668 = vmul.f32 %v634, 1.442695
        %v669 = vpow.pop %v668
        %v670 = vmul.f32 %v635, 1.442695
        %v671 = vpow.pop %v670
        %v672 = vmul.f32 %v636, 1.442695
        %v673 = vpow.pop %v672
        %v674 = vmul.f32 %v637, 1.442695
        %v675 = vpow.pop %v674
        %v676 = vmul.f32 %v638, 1.442695
        %v677 = vpow.pop %v676
        %v678 = vmul.f32 %v639, 1.442695
        %v679 = vpow.pop %v678
        %v680 = vmul.f32 %v640, 1.442695
        %v681 = vpow.pop %v680
        %v682 = vmul.f32 %v641, 1.442695
        %v683 = vpow.pop %v682
        %v684 = vmul.f32 %v642, 1.442695
        %v685 = vpow.pop %v684
        %v686 = vmul.f32 %v643, 1.442695
        %v687 = vpow.pop %v686
        %v688 = vmul.f32 %v644, 1.442695
        %v689 = vpow.pop %v688
        %v690 = vmul.f32 %v645, 1.442695
        %v691 = vpow.pop %v690
        %v692 = vmul.f32 %v646, 1.442695
        %v693 = vpow.pop %v692
        %v694 = vmul.f32 %v647, 1.442695
        %v695 = vpow.pop %v694
        %v696 = vmul.f32 %v648, 1.442695
        %v697 = vpow.pop %v696
        %v698 = vmul.f32 %v649, 1.442695
        %v699 = vpow.pop %v698
        %v700 = vmul.f32 %v650, 1.442695
        %v701 = vpow.pop %v700
        %v702 = vmul.f32 %v651, 1.442695
        %v703 = vpow.pop %v702
        %v704 = vmul.f32 %v652, 1.442695
        %v705 = vpow.pop %v704
        %v706 = vmul.f32 %v653, 1.442695
        %v707 = vpow.pop %v706
        %v708 = vmul.f32 %v654, 1.442695
        %v709 = vpow.pop %v708
        %v710 = vmul.f32 %v655, 1.442695
        %v711 = vpow.pop %v710
        %v712 = vmul.f32 %v656, 1.442695
        %v713 = vpow.pop %v712
        %v714 = vmul.f32 %v657, 1.442695
        %v715 = vpow.pop %v714
        %v716 = vmul.f32 %v658, 1.442695
        %v717 = vpow.pop %v716
        %v718 = vmul.f32 %v659, 1.442695
        %v719 = vpow.pop %v718
        %v720 = vmul.f32 %v660, 1.442695
        %v721 = vpow.pop %v720
        %v722 = vmul.f32 %v661, 1.442695
        %v723 = vpow.pop %v722
        %v724 = vmul.f32 %v662, 1.442695
        %v725 = vpow.pop %v724
        %v726 = vmul.f32 %v663, 1.442695
        %v727 = vpow.pop %v726
        %v728 = vadd.f32 %v665, 1.0
        %v729 = vadd.f32 %v667, 1.0
        %v730 = vadd.f32 %v669, 1.0
        %v731 = vadd.f32 %v671, 1.0
        %v732 = vadd.f32 %v673, 1.0
        %v733 = vadd.f32 %v675, 1.0
        %v734 = vadd.f32 %v677, 1.0
        %v735 = vadd.f32 %v679, 1.0
        %v736 = vadd.f32 %v681, 1.0
        %v737 = vadd.f32 %v683, 1.0
        %v738 = vadd.f32 %v685, 1.0
        %v739 = vadd.f32 %v687, 1.0
        %v740 = vadd.f32 %v689, 1.0
        %v741 = vadd.f32 %v691, 1.0
        %v742 = vadd.f32 %v693, 1.0
        %v743 = vadd.f32 %v695, 1.0
        %v744 = vadd.f32 %v697, 1.0
        %v745 = vadd.f32 %v699, 1.0
        %v746 = vadd.f32 %v701, 1.0
        %v747 = vadd.f32 %v703, 1.0
        %v748 = vadd.f32 %v705, 1.0
        %v749 = vadd.f32 %v707, 1.0
        %v750 = vadd.f32 %v709, 1.0
        %v751 = vadd.f32 %v711, 1.0
        %v752 = vadd.f32 %v713, 1.0
        %v753 = vadd.f32 %v715, 1.0
        %v754 = vadd.f32 %v717, 1.0
        %v755 = vadd.f32 %v719, 1.0
        %v756 = vadd.f32 %v721, 1.0
        %v757 = vadd.f32 %v723, 1.0
        %v758 = vadd.f32 %v725, 1.0
        %v759 = vadd.f32 %v727, 1.0
        %v760 = vrcp.pop %v728
        %v761 = vmul.f32 %v728, %v760
        %v762 = vsub.f32 1.0, %v761
        %v763 = vmul.f32 %v760, %v762
        %v764 = vadd.f32 %v760, %v763
        %vm765 = vweird.f32 %v728
        %vm766 = vweird.f32 %v760
        %vm767 = vmor %vm765, %vm766
        %v768 = vsel %vm767, %v760, %v764
        %v769 = vand.u32 2147483647, %v728
        %vm770 = vcmp.eq.f32.partialorder %v769, 8.507059e+37
        %v771 = vand.u32 %v728, 2147483648
        %v772 = vor.u32 1.1754944e-38, %v771
        %v773 = vsel %vm770, %v772, %v768
        %v774 = vmul.f32 1.0, %v773
        %v775 = vrcp.pop %v729
        %v776 = vmul.f32 %v729, %v775
        %v777 = vsub.f32 1.0, %v776
        %v778 = vmul.f32 %v775, %v777
        %v779 = vadd.f32 %v775, %v778
        %vm780 = vweird.f32 %v729
        %vm781 = vweird.f32 %v775
        %vm782 = vmor %vm780, %vm781
        %v783 = vsel %vm782, %v775, %v779
        %v784 = vand.u32 2147483647, %v729
        %vm785 = vcmp.eq.f32.partialorder %v784, 8.507059e+37
        %v786 = vand.u32 %v729, 2147483648
        %v787 = vor.u32 1.1754944e-38, %v786
        %v788 = vsel %vm785, %v787, %v783
        %v789 = vmul.f32 1.0, %v788
        %v790 = vrcp.pop %v730
        %v791 = vmul.f32 %v730, %v790
        %v792 = vsub.f32 1.0, %v791
        %v793 = vmul.f32 %v790, %v792
        %v794 = vadd.f32 %v790, %v793
        %vm795 = vweird.f32 %v730
        %vm796 = vweird.f32 %v790
        %vm797 = vmor %vm795, %vm796
        %v798 = vsel %vm797, %v790, %v794
        %v799 = vand.u32 2147483647, %v730
        %vm800 = vcmp.eq.f32.partialorder %v799, 8.507059e+37
        %v801 = vand.u32 %v730, 2147483648
        %v802 = vor.u32 1.1754944e-38, %v801
        %v803 = vsel %vm800, %v802, %v798
        %v804 = vmul.f32 1.0, %v803
        %v805 = vrcp.pop %v731
        %v806 = vmul.f32 %v731, %v805
        %v807 = vsub.f32 1.0, %v806
        %v808 = vmul.f32 %v805, %v807
        %v809 = vadd.f32 %v805, %v808
        %vm810 = vweird.f32 %v731
        %vm811 = vweird.f32 %v805
        %vm812 = vmor %vm810, %vm811
        %v813 = vsel %vm812, %v805, %v809
        %v814 = vand.u32 2147483647, %v731
        %vm815 = vcmp.eq.f32.partialorder %v814, 8.507059e+37
        %v816 = vand.u32 %v731, 2147483648
        %v817 = vor.u32 1.1754944e-38, %v816
        %v818 = vsel %vm815, %v817, %v813
        %v819 = vmul.f32 1.0, %v818
        %v820 = vrcp.pop %v732
        %v821 = vmul.f32 %v732, %v820
        %v822 = vsub.f32 1.0, %v821
        %v823 = vmul.f32 %v820, %v822
        %v824 = vadd.f32 %v820, %v823
        %vm825 = vweird.f32 %v732
        %vm826 = vweird.f32 %v820
        %vm827 = vmor %vm825, %vm826
        %v828 = vsel %vm827, %v820, %v824
        %v829 = vand.u32 2147483647, %v732
        %vm830 = vcmp.eq.f32.partialorder %v829, 8.507059e+37
        %v831 = vand.u32 %v732, 2147483648
        %v832 = vor.u32 1.1754944e-38, %v831
        %v833 = vsel %vm830, %v832, %v828
        %v834 = vmul.f32 1.0, %v833
        %v835 = vrcp.pop %v733
        %v836 = vmul.f32 %v733, %v835
        %v837 = vsub.f32 1.0, %v836
        %v838 = vmul.f32 %v835, %v837
        %v839 = vadd.f32 %v835, %v838
        %vm840 = vweird.f32 %v733
        %vm841 = vweird.f32 %v835
        %vm842 = vmor %vm840, %vm841
        %v843 = vsel %vm842, %v835, %v839
        %v844 = vand.u32 2147483647, %v733
        %vm845 = vcmp.eq.f32.partialorder %v844, 8.507059e+37
        %v846 = vand.u32 %v733, 2147483648
        %v847 = vor.u32 1.1754944e-38, %v846
        %v848 = vsel %vm845, %v847, %v843
        %v849 = vmul.f32 1.0, %v848
        %v850 = vrcp.pop %v734
        %v851 = vmul.f32 %v734, %v850
        %v852 = vsub.f32 1.0, %v851
        %v853 = vmul.f32 %v850, %v852
        %v854 = vadd.f32 %v850, %v853
        %vm855 = vweird.f32 %v734
        %vm856 = vweird.f32 %v850
        %vm857 = vmor %vm855, %vm856
        %v858 = vsel %vm857, %v850, %v854
        %v859 = vand.u32 2147483647, %v734
        %vm860 = vcmp.eq.f32.partialorder %v859, 8.507059e+37
        %v861 = vand.u32 %v734, 2147483648
        %v862 = vor.u32 1.1754944e-38, %v861
        %v863 = vsel %vm860, %v862, %v858
        %v864 = vmul.f32 1.0, %v863
        %v865 = vrcp.pop %v735
        %v866 = vmul.f32 %v735, %v865
        %v867 = vsub.f32 1.0, %v866
        %v868 = vmul.f32 %v865, %v867
        %v869 = vadd.f32 %v865, %v868
        %vm870 = vweird.f32 %v735
        %vm871 = vweird.f32 %v865
        %vm872 = vmor %vm870, %vm871
        %v873 = vsel %vm872, %v865, %v869
        %v874 = vand.u32 2147483647, %v735
        %vm875 = vcmp.eq.f32.partialorder %v874, 8.507059e+37
        %v876 = vand.u32 %v735, 2147483648
        %v877 = vor.u32 1.1754944e-38, %v876
        %v878 = vsel %vm875, %v877, %v873
        %v879 = vmul.f32 1.0, %v878
        %v880 = vrcp.pop %v736
        %v881 = vmul.f32 %v736, %v880
        %v882 = vsub.f32 1.0, %v881
        %v883 = vmul.f32 %v880, %v882
        %v884 = vadd.f32 %v880, %v883
        %vm885 = vweird.f32 %v736
        %vm886 = vweird.f32 %v880
        %vm887 = vmor %vm885, %vm886
        %v888 = vsel %vm887, %v880, %v884
        %v889 = vand.u32 2147483647, %v736
        %vm890 = vcmp.eq.f32.partialorder %v889, 8.507059e+37
        %v891 = vand.u32 %v736, 2147483648
        %v892 = vor.u32 1.1754944e-38, %v891
        %v893 = vsel %vm890, %v892, %v888
        %v894 = vmul.f32 1.0, %v893
        %v895 = vrcp.pop %v737
        %v896 = vmul.f32 %v737, %v895
        %v897 = vsub.f32 1.0, %v896
        %v898 = vmul.f32 %v895, %v897
        %v899 = vadd.f32 %v895, %v898
        %vm900 = vweird.f32 %v737
        %vm901 = vweird.f32 %v895
        %vm902 = vmor %vm900, %vm901
        %v903 = vsel %vm902, %v895, %v899
        %v904 = vand.u32 2147483647, %v737
        %vm905 = vcmp.eq.f32.partialorder %v904, 8.507059e+37
        %v906 = vand.u32 %v737, 2147483648
        %v907 = vor.u32 1.1754944e-38, %v906
        %v908 = vsel %vm905, %v907, %v903
        %v909 = vmul.f32 1.0, %v908
        %v910 = vrcp.pop %v738
        %v911 = vmul.f32 %v738, %v910
        %v912 = vsub.f32 1.0, %v911
        %v913 = vmul.f32 %v910, %v912
        %v914 = vadd.f32 %v910, %v913
        %vm915 = vweird.f32 %v738
        %vm916 = vweird.f32 %v910
        %vm917 = vmor %vm915, %vm916
        %v918 = vsel %vm917, %v910, %v914
        %v919 = vand.u32 2147483647, %v738
        %vm920 = vcmp.eq.f32.partialorder %v919, 8.507059e+37
        %v921 = vand.u32 %v738, 2147483648
        %v922 = vor.u32 1.1754944e-38, %v921
        %v923 = vsel %vm920, %v922, %v918
        %v924 = vmul.f32 1.0, %v923
        %v925 = vrcp.pop %v739
        %v926 = vmul.f32 %v739, %v925
        %v927 = vsub.f32 1.0, %v926
        %v928 = vmul.f32 %v925, %v927
        %v929 = vadd.f32 %v925, %v928
        %vm930 = vweird.f32 %v739
        %vm931 = vweird.f32 %v925
        %vm932 = vmor %vm930, %vm931
        %v933 = vsel %vm932, %v925, %v929
        %v934 = vand.u32 2147483647, %v739
        %vm935 = vcmp.eq.f32.partialorder %v934, 8.507059e+37
        %v936 = vand.u32 %v739, 2147483648
        %v937 = vor.u32 1.1754944e-38, %v936
        %v938 = vsel %vm935, %v937, %v933
        %v939 = vmul.f32 1.0, %v938
        %v940 = vrcp.pop %v740
        %v941 = vmul.f32 %v740, %v940
        %v942 = vsub.f32 1.0, %v941
        %v943 = vmul.f32 %v940, %v942
        %v944 = vadd.f32 %v940, %v943
        %vm945 = vweird.f32 %v740
        %vm946 = vweird.f32 %v940
        %vm947 = vmor %vm945, %vm946
        %v948 = vsel %vm947, %v940, %v944
        %v949 = vand.u32 2147483647, %v740
        %vm950 = vcmp.eq.f32.partialorder %v949, 8.507059e+37
        %v951 = vand.u32 %v740, 2147483648
        %v952 = vor.u32 1.1754944e-38, %v951
        %v953 = vsel %vm950, %v952, %v948
        %v954 = vmul.f32 1.0, %v953
        %v955 = vrcp.pop %v741
        %v956 = vmul.f32 %v741, %v955
        %v957 = vsub.f32 1.0, %v956
        %v958 = vmul.f32 %v955, %v957
        %v959 = vadd.f32 %v955, %v958
        %vm960 = vweird.f32 %v741
        %vm961 = vweird.f32 %v955
        %vm962 = vmor %vm960, %vm961
        %v963 = vsel %vm962, %v955, %v959
        %v964 = vand.u32 2147483647, %v741
        %vm965 = vcmp.eq.f32.partialorder %v964, 8.507059e+37
        %v966 = vand.u32 %v741, 2147483648
        %v967 = vor.u32 1.1754944e-38, %v966
        %v968 = vsel %vm965, %v967, %v963
        %v969 = vmul.f32 1.0, %v968
        %v970 = vrcp.pop %v742
        %v971 = vmul.f32 %v742, %v970
        %v972 = vsub.f32 1.0, %v971
        %v973 = vmul.f32 %v970, %v972
        %v974 = vadd.f32 %v970, %v973
        %vm975 = vweird.f32 %v742
        %vm976 = vweird.f32 %v970
        %vm977 = vmor %vm975, %vm976
        %v978 = vsel %vm977, %v970, %v974
        %v979 = vand.u32 2147483647, %v742
        %vm980 = vcmp.eq.f32.partialorder %v979, 8.507059e+37
        %v981 = vand.u32 %v742, 2147483648
        %v982 = vor.u32 1.1754944e-38, %v981
        %v983 = vsel %vm980, %v982, %v978
        %v984 = vmul.f32 1.0, %v983
        %v985 = vrcp.pop %v743
        %v986 = vmul.f32 %v743, %v985
        %v987 = vsub.f32 1.0, %v986
        %v988 = vmul.f32 %v985, %v987
        %v989 = vadd.f32 %v985, %v988
        %vm990 = vweird.f32 %v743
        %vm991 = vweird.f32 %v985
        %vm992 = vmor %vm990, %vm991
        %v993 = vsel %vm992, %v985, %v989
        %v994 = vand.u32 2147483647, %v743
        %vm995 = vcmp.eq.f32.partialorder %v994, 8.507059e+37
        %v996 = vand.u32 %v743, 2147483648
        %v997 = vor.u32 1.1754944e-38, %v996
        %v998 = vsel %vm995, %v997, %v993
        %v999 = vmul.f32 1.0, %v998
        %v1000 = vrcp.pop %v744
        %v1001 = vmul.f32 %v744, %v1000
        %v1002 = vsub.f32 1.0, %v1001
        %v1003 = vmul.f32 %v1000, %v1002
        %v1004 = vadd.f32 %v1000, %v1003
        %vm1005 = vweird.f32 %v744
        %vm1006 = vweird.f32 %v1000
        %vm1007 = vmor %vm1005, %vm1006
        %v1008 = vsel %vm1007, %v1000, %v1004
        %v1009 = vand.u32 2147483647, %v744
        %vm1010 = vcmp.eq.f32.partialorder %v1009, 8.507059e+37
        %v1011 = vand.u32 %v744, 2147483648
        %v1012 = vor.u32 1.1754944e-38, %v1011
        %v1013 = vsel %vm1010, %v1012, %v1008
        %v1014 = vmul.f32 1.0, %v1013
        %v1015 = vrcp.pop %v745
        %v1016 = vmul.f32 %v745, %v1015
        %v1017 = vsub.f32 1.0, %v1016
        %v1018 = vmul.f32 %v1015, %v1017
        %v1019 = vadd.f32 %v1015, %v1018
        %vm1020 = vweird.f32 %v745
        %vm1021 = vweird.f32 %v1015
        %vm1022 = vmor %vm1020, %vm1021
        %v1023 = vsel %vm1022, %v1015, %v1019
        %v1024 = vand.u32 2147483647, %v745
        %vm1025 = vcmp.eq.f32.partialorder %v1024, 8.507059e+37
        %v1026 = vand.u32 %v745, 2147483648
        %v1027 = vor.u32 1.1754944e-38, %v1026
        %v1028 = vsel %vm1025, %v1027, %v1023
        %v1029 = vmul.f32 1.0, %v1028
        %v1030 = vrcp.pop %v746
        %v1031 = vmul.f32 %v746, %v1030
        %v1032 = vsub.f32 1.0, %v1031
        %v1033 = vmul.f32 %v1030, %v1032
        %v1034 = vadd.f32 %v1030, %v1033
        %vm1035 = vweird.f32 %v746
        %vm1036 = vweird.f32 %v1030
        %vm1037 = vmor %vm1035, %vm1036
        %v1038 = vsel %vm1037, %v1030, %v1034
        %v1039 = vand.u32 2147483647, %v746
        %vm1040 = vcmp.eq.f32.partialorder %v1039, 8.507059e+37
        %v1041 = vand.u32 %v746, 2147483648
        %v1042 = vor.u32 1.1754944e-38, %v1041
        %v1043 = vsel %vm1040, %v1042, %v1038
        %v1044 = vmul.f32 1.0, %v1043
        %v1045 = vrcp.pop %v747
        %v1046 = vmul.f32 %v747, %v1045
        %v1047 = vsub.f32 1.0, %v1046
        %v1048 = vmul.f32 %v1045, %v1047
        %v1049 = vadd.f32 %v1045, %v1048
        %vm1050 = vweird.f32 %v747
        %vm1051 = vweird.f32 %v1045
        %vm1052 = vmor %vm1050, %vm1051
        %v1053 = vsel %vm1052, %v1045, %v1049
        %v1054 = vand.u32 2147483647, %v747
        %vm1055 = vcmp.eq.f32.partialorder %v1054, 8.507059e+37
        %v1056 = vand.u32 %v747, 2147483648
        %v1057 = vor.u32 1.1754944e-38, %v1056
        %v1058 = vsel %vm1055, %v1057, %v1053
        %v1059 = vmul.f32 1.0, %v1058
        %v1060 = vrcp.pop %v748
        %v1061 = vmul.f32 %v748, %v1060
        %v1062 = vsub.f32 1.0, %v1061
        %v1063 = vmul.f32 %v1060, %v1062
        %v1064 = vadd.f32 %v1060, %v1063
        %vm1065 = vweird.f32 %v748
        %vm1066 = vweird.f32 %v1060
        %vm1067 = vmor %vm1065, %vm1066
        %v1068 = vsel %vm1067, %v1060, %v1064
        %v1069 = vand.u32 2147483647, %v748
        %vm1070 = vcmp.eq.f32.partialorder %v1069, 8.507059e+37
        %v1071 = vand.u32 %v748, 2147483648
        %v1072 = vor.u32 1.1754944e-38, %v1071
        %v1073 = vsel %vm1070, %v1072, %v1068
        %v1074 = vmul.f32 1.0, %v1073
        %v1075 = vrcp.pop %v749
        %v1076 = vmul.f32 %v749, %v1075
        %v1077 = vsub.f32 1.0, %v1076
        %v1078 = vmul.f32 %v1075, %v1077
        %v1079 = vadd.f32 %v1075, %v1078
        %vm1080 = vweird.f32 %v749
        %vm1081 = vweird.f32 %v1075
        %vm1082 = vmor %vm1080, %vm1081
        %v1083 = vsel %vm1082, %v1075, %v1079
        %v1084 = vand.u32 2147483647, %v749
        %vm1085 = vcmp.eq.f32.partialorder %v1084, 8.507059e+37
        %v1086 = vand.u32 %v749, 2147483648
        %v1087 = vor.u32 1.1754944e-38, %v1086
        %v1088 = vsel %vm1085, %v1087, %v1083
        %v1089 = vmul.f32 1.0, %v1088
        %v1090 = vrcp.pop %v750
        %v1091 = vmul.f32 %v750, %v1090
        %v1092 = vsub.f32 1.0, %v1091
        %v1093 = vmul.f32 %v1090, %v1092
        %v1094 = vadd.f32 %v1090, %v1093
        %vm1095 = vweird.f32 %v750
        %vm1096 = vweird.f32 %v1090
        %vm1097 = vmor %vm1095, %vm1096
        %v1098 = vsel %vm1097, %v1090, %v1094
        %v1099 = vand.u32 2147483647, %v750
        %vm1100 = vcmp.eq.f32.partialorder %v1099, 8.507059e+37
        %v1101 = vand.u32 %v750, 2147483648
        %v1102 = vor.u32 1.1754944e-38, %v1101
        %v1103 = vsel %vm1100, %v1102, %v1098
        %v1104 = vmul.f32 1.0, %v1103
        %v1105 = vrcp.pop %v751
        %v1106 = vmul.f32 %v751, %v1105
        %v1107 = vsub.f32 1.0, %v1106
        %v1108 = vmul.f32 %v1105, %v1107
        %v1109 = vadd.f32 %v1105, %v1108
        %vm1110 = vweird.f32 %v751
        %vm1111 = vweird.f32 %v1105
        %vm1112 = vmor %vm1110, %vm1111
        %v1113 = vsel %vm1112, %v1105, %v1109
        %v1114 = vand.u32 2147483647, %v751
        %vm1115 = vcmp.eq.f32.partialorder %v1114, 8.507059e+37
        %v1116 = vand.u32 %v751, 2147483648
        %v1117 = vor.u32 1.1754944e-38, %v1116
        %v1118 = vsel %vm1115, %v1117, %v1113
        %v1119 = vmul.f32 1.0, %v1118
        %v1120 = vrcp.pop %v752
        %v1121 = vmul.f32 %v752, %v1120
        %v1122 = vsub.f32 1.0, %v1121
        %v1123 = vmul.f32 %v1120, %v1122
        %v1124 = vadd.f32 %v1120, %v1123
        %vm1125 = vweird.f32 %v752
        %vm1126 = vweird.f32 %v1120
        %vm1127 = vmor %vm1125, %vm1126
        %v1128 = vsel %vm1127, %v1120, %v1124
        %v1129 = vand.u32 2147483647, %v752
        %vm1130 = vcmp.eq.f32.partialorder %v1129, 8.507059e+37
        %v1131 = vand.u32 %v752, 2147483648
        %v1132 = vor.u32 1.1754944e-38, %v1131
        %v1133 = vsel %vm1130, %v1132, %v1128
        %v1134 = vmul.f32 1.0, %v1133
        %v1135 = vrcp.pop %v753
        %v1136 = vmul.f32 %v753, %v1135
        %v1137 = vsub.f32 1.0, %v1136
        %v1138 = vmul.f32 %v1135, %v1137
        %v1139 = vadd.f32 %v1135, %v1138
        %vm1140 = vweird.f32 %v753
        %vm1141 = vweird.f32 %v1135
        %vm1142 = vmor %vm1140, %vm1141
        %v1143 = vsel %vm1142, %v1135, %v1139
        %v1144 = vand.u32 2147483647, %v753
        %vm1145 = vcmp.eq.f32.partialorder %v1144, 8.507059e+37
        %v1146 = vand.u32 %v753, 2147483648
        %v1147 = vor.u32 1.1754944e-38, %v1146
        %v1148 = vsel %vm1145, %v1147, %v1143
        %v1149 = vmul.f32 1.0, %v1148
        %v1150 = vrcp.pop %v754
        %v1151 = vmul.f32 %v754, %v1150
        %v1152 = vsub.f32 1.0, %v1151
        %v1153 = vmul.f32 %v1150, %v1152
        %v1154 = vadd.f32 %v1150, %v1153
        %vm1155 = vweird.f32 %v754
        %vm1156 = vweird.f32 %v1150
        %vm1157 = vmor %vm1155, %vm1156
        %v1158 = vsel %vm1157, %v1150, %v1154
        %v1159 = vand.u32 2147483647, %v754
        %vm1160 = vcmp.eq.f32.partialorder %v1159, 8.507059e+37
        %v1161 = vand.u32 %v754, 2147483648
        %v1162 = vor.u32 1.1754944e-38, %v1161
        %v1163 = vsel %vm1160, %v1162, %v1158
        %v1164 = vmul.f32 1.0, %v1163
        %v1165 = vrcp.pop %v755
        %v1166 = vmul.f32 %v755, %v1165
        %v1167 = vsub.f32 1.0, %v1166
        %v1168 = vmul.f32 %v1165, %v1167
        %v1169 = vadd.f32 %v1165, %v1168
        %vm1170 = vweird.f32 %v755
        %vm1171 = vweird.f32 %v1165
        %vm1172 = vmor %vm1170, %vm1171
        %v1173 = vsel %vm1172, %v1165, %v1169
        %v1174 = vand.u32 2147483647, %v755
        %vm1175 = vcmp.eq.f32.partialorder %v1174, 8.507059e+37
        %v1176 = vand.u32 %v755, 2147483648
        %v1177 = vor.u32 1.1754944e-38, %v1176
        %v1178 = vsel %vm1175, %v1177, %v1173
        %v1179 = vmul.f32 1.0, %v1178
        %v1180 = vrcp.pop %v756
        %v1181 = vmul.f32 %v756, %v1180
        %v1182 = vsub.f32 1.0, %v1181
        %v1183 = vmul.f32 %v1180, %v1182
        %v1184 = vadd.f32 %v1180, %v1183
        %vm1185 = vweird.f32 %v756
        %vm1186 = vweird.f32 %v1180
        %vm1187 = vmor %vm1185, %vm1186
        %v1188 = vsel %vm1187, %v1180, %v1184
        %v1189 = vand.u32 2147483647, %v756
        %vm1190 = vcmp.eq.f32.partialorder %v1189, 8.507059e+37
        %v1191 = vand.u32 %v756, 2147483648
        %v1192 = vor.u32 1.1754944e-38, %v1191
        %v1193 = vsel %vm1190, %v1192, %v1188
        %v1194 = vmul.f32 1.0, %v1193
        %v1195 = vrcp.pop %v757
        %v1196 = vmul.f32 %v757, %v1195
        %v1197 = vsub.f32 1.0, %v1196
        %v1198 = vmul.f32 %v1195, %v1197
        %v1199 = vadd.f32 %v1195, %v1198
        %vm1200 = vweird.f32 %v757
        %vm1201 = vweird.f32 %v1195
        %vm1202 = vmor %vm1200, %vm1201
        %v1203 = vsel %vm1202, %v1195, %v1199
        %v1204 = vand.u32 2147483647, %v757
        %vm1205 = vcmp.eq.f32.partialorder %v1204, 8.507059e+37
        %v1206 = vand.u32 %v757, 2147483648
        %v1207 = vor.u32 1.1754944e-38, %v1206
        %v1208 = vsel %vm1205, %v1207, %v1203
        %v1209 = vmul.f32 1.0, %v1208
        %v1210 = vrcp.pop %v758
        %v1211 = vmul.f32 %v758, %v1210
        %v1212 = vsub.f32 1.0, %v1211
        %v1213 = vmul.f32 %v1210, %v1212
        %v1214 = vadd.f32 %v1210, %v1213
        %vm1215 = vweird.f32 %v758
        %vm1216 = vweird.f32 %v1210
        %vm1217 = vmor %vm1215, %vm1216
        %v1218 = vsel %vm1217, %v1210, %v1214
        %v1219 = vand.u32 2147483647, %v758
        %vm1220 = vcmp.eq.f32.partialorder %v1219, 8.507059e+37
        %v1221 = vand.u32 %v758, 2147483648
        %v1222 = vor.u32 1.1754944e-38, %v1221
        %v1223 = vsel %vm1220, %v1222, %v1218
        %v1224 = vmul.f32 1.0, %v1223
        %v1225 = vrcp.pop %v759
        %v1226 = vmul.f32 %v759, %v1225
        %v1227 = vsub.f32 1.0, %v1226
        %v1228 = vmul.f32 %v1225, %v1227
        %v1229 = vadd.f32 %v1225, %v1228
        %vm1230 = vweird.f32 %v759
        %vm1231 = vweird.f32 %v1225
        %vm1232 = vmor %vm1230, %vm1231
        %v1233 = vsel %vm1232, %v1225, %v1229
        %v1234 = vand.u32 2147483647, %v759
        %vm1235 = vcmp.eq.f32.partialorder %v1234, 8.507059e+37
        %v1236 = vand.u32 %v759, 2147483648
        %v1237 = vor.u32 1.1754944e-38, %v1236
        %v1238 = vsel %vm1235, %v1237, %v1233
        %v1239 = vmul.f32 1.0, %v1238
        %v1240 = vmul.f32 %v553, %v774
        %v1241 = vmul.f32 %v555, %v789
        %v1242 = vmul.f32 %v558, %v804
        %v1243 = vmul.f32 %v560, %v819
        %v1244 = vmul.f32 %v563, %v834
        %v1245 = vmul.f32 %v565, %v849
        %v1246 = vmul.f32 %v568, %v864
        %v1247 = vmul.f32 %v570, %v879
        %v1248 = vmul.f32 %v573, %v894
        %v1249 = vmul.f32 %v575, %v909
        %v1250 = vmul.f32 %v578, %v924
        %v1251 = vmul.f32 %v580, %v939
        %v1252 = vmul.f32 %v583, %v954
        %v1253 = vmul.f32 %v585, %v969
        %v1254 = vmul.f32 %v588, %v984
        %v1255 = vmul.f32 %v590, %v999
        %v1256 = vmul.f32 %v593, %v1014
        %v1257 = vmul.f32 %v595, %v1029
        %v1258 = vmul.f32 %v598, %v1044
        %v1259 = vmul.f32 %v600, %v1059
        %v1260 = vmul.f32 %v603, %v1074
        %v1261 = vmul.f32 %v605, %v1089
        %v1262 = vmul.f32 %v608, %v1104
        %v1263 = vmul.f32 %v610, %v1119
        %v1264 = vmul.f32 %v613, %v1134
        %v1265 = vmul.f32 %v615, %v1149
        %v1266 = vmul.f32 %v618, %v1164
        %v1267 = vmul.f32 %v620, %v1179
        %v1268 = vmul.f32 %v623, %v1194
        %v1269 = vmul.f32 %v625, %v1209
        %v1270 = vmul.f32 %v628, %v1224
        %v1271 = vmul.f32 %v630, %v1239
        %v1272 = vpack.c.bf16 %v1241, %v1240
        %v1273 = vpack.c.bf16 %v1243, %v1242
        %v1274 = vpack.c.bf16 %v1245, %v1244
        %v1275 = vpack.c.bf16 %v1247, %v1246
        %v1276 = vpack.c.bf16 %v1249, %v1248
        %v1277 = vpack.c.bf16 %v1251, %v1250
        %v1278 = vpack.c.bf16 %v1253, %v1252
        %v1279 = vpack.c.bf16 %v1255, %v1254
        %v1280 = vpack.c.bf16 %v1257, %v1256
        %v1281 = vpack.c.bf16 %v1259, %v1258
        %v1282 = vpack.c.bf16 %v1261, %v1260
        %v1283 = vpack.c.bf16 %v1263, %v1262
        %v1284 = vpack.c.bf16 %v1265, %v1264
        %v1285 = vpack.c.bf16 %v1267, %v1266
        %v1286 = vpack.c.bf16 %v1269, %v1268
        %v1287 = vpack.c.bf16 %v1271, %v1270
        %v1288 = vld [vmem:[%s296] sm:$0xf]
        %v1289 = vld [vmem:[%s296 + $0x4] sm:$0xf]
        %v1290 = vld [vmem:[%s296 + $0x8] sm:$0xf]
        %v1291 = vld [vmem:[%s296 + $0xc] sm:$0xf]
        %v1292 = vld [vmem:[%s347] sm:$0x1]
        %v1294 = vperm.slane %v1292, 0
        %v1300 = vunpack.c.l.b16 %v1288
        %v1301 = vunpack.c.l.b16 %v1289
        %v1302 = vunpack.c.l.b16 %v1290
        %v1303 = vunpack.c.l.b16 %v1291
        %v1304 = vpack.c.b16 %v1301, %v1300
        %v1305 = vpack.c.b16 %v1303, %v1302
        %vm1308 = vcmask 261120
        %v1310 = vsel %vm1308, %v1272, 0
        %v1313 = vsel %vm1308, %v1273, 0
        %v1316 = vsel %vm1308, %v1274, 0
        %v1319 = vsel %vm1308, %v1275, 0
        %v1322 = vsel %vm1308, %v1276, 0
        %v1325 = vsel %vm1308, %v1277, 0
        %v1328 = vsel %vm1308, %v1278, 0
        %v1331 = vsel %vm1308, %v1279, 0
        %v1334 = vsel %vm1308, %v1280, 0
        %v1337 = vsel %vm1308, %v1281, 0
        %v1340 = vsel %vm1308, %v1282, 0
        %v1343 = vsel %vm1308, %v1283, 0
        %v1346 = vsel %vm1308, %v1284, 0
        %v1349 = vsel %vm1308, %v1285, 0
        %v1352 = vsel %vm1308, %v1286, 0
        %v1355 = vsel %vm1308, %v1287, 0
        %1357 = vmatpush.bf16.msra.mxu0 0
        %1358 = vmatpush.bf16.msra.mxu0 0
        %1359 = vmatpush.bf16.msra.mxu0 0
        %1360 = vmatpush.bf16.msra.mxu0 0
        %1361 = vmatpush.bf16.msra.mxu0 0
        %1362 = vmatpush.bf16.msra.mxu0 0
        %1363 = vmatpush.bf16.msra.mxu0 %v1305
        %1364 = vmatpush.bf16.msra.mxu0 %v1304
        %1365 = vmatmul.bf16.gmra.mxu0 %v1310
        %v1366 = vpop.f32.mrf.mxu0
        %v1367 = vadd.f32 %v1294, %v1366
        %v1368 = vpop.f32.mrf.mxu0
        %v1369 = vadd.f32 %v1294, %v1368
        %1370 = vmatmul.bf16.gmra.mxu0 %v1313
        %v1371 = vpop.f32.mrf.mxu0
        %v1372 = vadd.f32 %v1294, %v1371
        %v1373 = vpop.f32.mrf.mxu0
        %v1374 = vadd.f32 %v1294, %v1373
        %1375 = vmatmul.bf16.gmra.mxu0 %v1316
        %v1376 = vpop.f32.mrf.mxu0
        %v1377 = vadd.f32 %v1294, %v1376
        %v1378 = vpop.f32.mrf.mxu0
        %v1379 = vadd.f32 %v1294, %v1378
        %1380 = vmatmul.bf16.gmra.mxu0 %v1319
        %v1381 = vpop.f32.mrf.mxu0
        %v1382 = vadd.f32 %v1294, %v1381
        %v1383 = vpop.f32.mrf.mxu0
        %v1384 = vadd.f32 %v1294, %v1383
        %1385 = vmatmul.bf16.gmra.mxu0 %v1322
        %v1386 = vpop.f32.mrf.mxu0
        %v1387 = vadd.f32 %v1294, %v1386
        %v1388 = vpop.f32.mrf.mxu0
        %v1389 = vadd.f32 %v1294, %v1388
        %1390 = vmatmul.bf16.gmra.mxu0 %v1325
        %v1391 = vpop.f32.mrf.mxu0
        %v1392 = vadd.f32 %v1294, %v1391
        %v1393 = vpop.f32.mrf.mxu0
        %v1394 = vadd.f32 %v1294, %v1393
        %1395 = vmatmul.bf16.gmra.mxu0 %v1328
        %v1396 = vpop.f32.mrf.mxu0
        %v1397 = vadd.f32 %v1294, %v1396
        %v1398 = vpop.f32.mrf.mxu0
        %v1399 = vadd.f32 %v1294, %v1398
        %1400 = vmatmul.bf16.gmra.mxu0 %v1331
        %v1401 = vpop.f32.mrf.mxu0
        %v1402 = vadd.f32 %v1294, %v1401
        %v1403 = vpop.f32.mrf.mxu0
        %v1404 = vadd.f32 %v1294, %v1403
        %1405 = vmatmul.bf16.gmra.mxu0 %v1334
        %v1406 = vpop.f32.mrf.mxu0
        %v1407 = vadd.f32 %v1294, %v1406
        %v1408 = vpop.f32.mrf.mxu0
        %v1409 = vadd.f32 %v1294, %v1408
        %1410 = vmatmul.bf16.gmra.mxu0 %v1337
        %v1411 = vpop.f32.mrf.mxu0
        %v1412 = vadd.f32 %v1294, %v1411
        %v1413 = vpop.f32.mrf.mxu0
        %v1414 = vadd.f32 %v1294, %v1413
        %1415 = vmatmul.bf16.gmra.mxu0 %v1340
        %v1416 = vpop.f32.mrf.mxu0
        %v1417 = vadd.f32 %v1294, %v1416
        %v1418 = vpop.f32.mrf.mxu0
        %v1419 = vadd.f32 %v1294, %v1418
        %1420 = vmatmul.bf16.gmra.mxu0 %v1343
        %v1421 = vpop.f32.mrf.mxu0
        %v1422 = vadd.f32 %v1294, %v1421
        %v1423 = vpop.f32.mrf.mxu0
        %v1424 = vadd.f32 %v1294, %v1423
        %1425 = vmatmul.bf16.gmra.mxu0 %v1346
        %v1426 = vpop.f32.mrf.mxu0
        %v1427 = vadd.f32 %v1294, %v1426
        %v1428 = vpop.f32.mrf.mxu0
        %v1429 = vadd.f32 %v1294, %v1428
        %1430 = vmatmul.bf16.gmra.mxu0 %v1349
        %v1431 = vpop.f32.mrf.mxu0
        %v1432 = vadd.f32 %v1294, %v1431
        %v1433 = vpop.f32.mrf.mxu0
        %v1434 = vadd.f32 %v1294, %v1433
        %1435 = vmatmul.bf16.gmra.mxu0 %v1352
        %v1436 = vpop.f32.mrf.mxu0
        %v1437 = vadd.f32 %v1294, %v1436
        %v1438 = vpop.f32.mrf.mxu0
        %v1439 = vadd.f32 %v1294, %v1438
        %1440 = vmatmul.bf16.gmra.mxu0 %v1355
        %v1441 = vpop.f32.mrf.mxu0
        %v1442 = vadd.f32 %v1294, %v1441
        %v1443 = vpop.f32.mrf.mxu0
        %v1444 = vadd.f32 %v1294, %v1443
        %1445 = vdwg.mxu0
        %v1446 = vxor.u32 %v1367, 2147483648
        %v1447 = vxor.u32 %v1369, 2147483648
        %v1448 = vxor.u32 %v1372, 2147483648
        %v1449 = vxor.u32 %v1374, 2147483648
        %v1450 = vxor.u32 %v1377, 2147483648
        %v1451 = vxor.u32 %v1379, 2147483648
        %v1452 = vxor.u32 %v1382, 2147483648
        %v1453 = vxor.u32 %v1384, 2147483648
        %v1454 = vxor.u32 %v1387, 2147483648
        %v1455 = vxor.u32 %v1389, 2147483648
        %v1456 = vxor.u32 %v1392, 2147483648
        %v1457 = vxor.u32 %v1394, 2147483648
        %v1458 = vxor.u32 %v1397, 2147483648
        %v1459 = vxor.u32 %v1399, 2147483648
        %v1460 = vxor.u32 %v1402, 2147483648
        %v1461 = vxor.u32 %v1404, 2147483648
        %v1462 = vxor.u32 %v1407, 2147483648
        %v1463 = vxor.u32 %v1409, 2147483648
        %v1464 = vxor.u32 %v1412, 2147483648
        %v1465 = vxor.u32 %v1414, 2147483648
        %v1466 = vxor.u32 %v1417, 2147483648
        %v1467 = vxor.u32 %v1419, 2147483648
        %v1468 = vxor.u32 %v1422, 2147483648
        %v1469 = vxor.u32 %v1424, 2147483648
        %v1470 = vxor.u32 %v1427, 2147483648
        %v1471 = vxor.u32 %v1429, 2147483648
        %v1472 = vxor.u32 %v1432, 2147483648
        %v1473 = vxor.u32 %v1434, 2147483648
        %v1474 = vxor.u32 %v1437, 2147483648
        %v1475 = vxor.u32 %v1439, 2147483648
        %v1476 = vxor.u32 %v1442, 2147483648
        %v1477 = vxor.u32 %v1444, 2147483648
        %v1478 = vmul.f32 %v1446, 1.442695
        %v1479 = vpow.pop %v1478
        %v1480 = vmul.f32 %v1447, 1.442695
        %v1481 = vpow.pop %v1480
        %v1482 = vmul.f32 %v1448, 1.442695
        %v1483 = vpow.pop %v1482
        %v1484 = vmul.f32 %v1449, 1.442695
        %v1485 = vpow.pop %v1484
        %v1486 = vmul.f32 %v1450, 1.442695
        %v1487 = vpow.pop %v1486
        %v1488 = vmul.f32 %v1451, 1.442695
        %v1489 = vpow.pop %v1488
        %v1490 = vmul.f32 %v1452, 1.442695
        %v1491 = vpow.pop %v1490
        %v1492 = vmul.f32 %v1453, 1.442695
        %v1493 = vpow.pop %v1492
        %v1494 = vmul.f32 %v1454, 1.442695
        %v1495 = vpow.pop %v1494
        %v1496 = vmul.f32 %v1455, 1.442695
        %v1497 = vpow.pop %v1496
        %v1498 = vmul.f32 %v1456, 1.442695
        %v1499 = vpow.pop %v1498
        %v1500 = vmul.f32 %v1457, 1.442695
        %v1501 = vpow.pop %v1500
        %v1502 = vmul.f32 %v1458, 1.442695
        %v1503 = vpow.pop %v1502
        %v1504 = vmul.f32 %v1459, 1.442695
        %v1505 = vpow.pop %v1504
        %v1506 = vmul.f32 %v1460, 1.442695
        %v1507 = vpow.pop %v1506
        %v1508 = vmul.f32 %v1461, 1.442695
        %v1509 = vpow.pop %v1508
        %v1510 = vmul.f32 %v1462, 1.442695
        %v1511 = vpow.pop %v1510
        %v1512 = vmul.f32 %v1463, 1.442695
        %v1513 = vpow.pop %v1512
        %v1514 = vmul.f32 %v1464, 1.442695
        %v1515 = vpow.pop %v1514
        %v1516 = vmul.f32 %v1465, 1.442695
        %v1517 = vpow.pop %v1516
        %v1518 = vmul.f32 %v1466, 1.442695
        %v1519 = vpow.pop %v1518
        %v1520 = vmul.f32 %v1467, 1.442695
        %v1521 = vpow.pop %v1520
        %v1522 = vmul.f32 %v1468, 1.442695
        %v1523 = vpow.pop %v1522
        %v1524 = vmul.f32 %v1469, 1.442695
        %v1525 = vpow.pop %v1524
        %v1526 = vmul.f32 %v1470, 1.442695
        %v1527 = vpow.pop %v1526
        %v1528 = vmul.f32 %v1471, 1.442695
        %v1529 = vpow.pop %v1528
        %v1530 = vmul.f32 %v1472, 1.442695
        %v1531 = vpow.pop %v1530
        %v1532 = vmul.f32 %v1473, 1.442695
        %v1533 = vpow.pop %v1532
        %v1534 = vmul.f32 %v1474, 1.442695
        %v1535 = vpow.pop %v1534
        %v1536 = vmul.f32 %v1475, 1.442695
        %v1537 = vpow.pop %v1536
        %v1538 = vmul.f32 %v1476, 1.442695
        %v1539 = vpow.pop %v1538
        %v1540 = vmul.f32 %v1477, 1.442695
        %v1541 = vpow.pop %v1540
        %v1542 = vadd.f32 %v1479, 1.0
        %v1543 = vadd.f32 %v1481, 1.0
        %v1544 = vadd.f32 %v1483, 1.0
        %v1545 = vadd.f32 %v1485, 1.0
        %v1546 = vadd.f32 %v1487, 1.0
        %v1547 = vadd.f32 %v1489, 1.0
        %v1548 = vadd.f32 %v1491, 1.0
        %v1549 = vadd.f32 %v1493, 1.0
        %v1550 = vadd.f32 %v1495, 1.0
        %v1551 = vadd.f32 %v1497, 1.0
        %v1552 = vadd.f32 %v1499, 1.0
        %v1553 = vadd.f32 %v1501, 1.0
        %v1554 = vadd.f32 %v1503, 1.0
        %v1555 = vadd.f32 %v1505, 1.0
        %v1556 = vadd.f32 %v1507, 1.0
        %v1557 = vadd.f32 %v1509, 1.0
        %v1558 = vadd.f32 %v1511, 1.0
        %v1559 = vadd.f32 %v1513, 1.0
        %v1560 = vadd.f32 %v1515, 1.0
        %v1561 = vadd.f32 %v1517, 1.0
        %v1562 = vadd.f32 %v1519, 1.0
        %v1563 = vadd.f32 %v1521, 1.0
        %v1564 = vadd.f32 %v1523, 1.0
        %v1565 = vadd.f32 %v1525, 1.0
        %v1566 = vadd.f32 %v1527, 1.0
        %v1567 = vadd.f32 %v1529, 1.0
        %v1568 = vadd.f32 %v1531, 1.0
        %v1569 = vadd.f32 %v1533, 1.0
        %v1570 = vadd.f32 %v1535, 1.0
        %v1571 = vadd.f32 %v1537, 1.0
        %v1572 = vadd.f32 %v1539, 1.0
        %v1573 = vadd.f32 %v1541, 1.0
        %v1574 = vrcp.pop %v1542
        %v1575 = vmul.f32 %v1542, %v1574
        %v1576 = vsub.f32 1.0, %v1575
        %v1577 = vmul.f32 %v1574, %v1576
        %v1578 = vadd.f32 %v1574, %v1577
        %vm1579 = vweird.f32 %v1542
        %vm1580 = vweird.f32 %v1574
        %vm1581 = vmor %vm1579, %vm1580
        %v1582 = vsel %vm1581, %v1574, %v1578
        %v1583 = vand.u32 2147483647, %v1542
        %vm1584 = vcmp.eq.f32.partialorder %v1583, 8.507059e+37
        %v1585 = vand.u32 %v1542, 2147483648
        %v1586 = vor.u32 1.1754944e-38, %v1585
        %v1587 = vsel %vm1584, %v1586, %v1582
        %v1588 = vmul.f32 1.0, %v1587
        %v1589 = vrcp.pop %v1543
        %v1590 = vmul.f32 %v1543, %v1589
        %v1591 = vsub.f32 1.0, %v1590
        %v1592 = vmul.f32 %v1589, %v1591
        %v1593 = vadd.f32 %v1589, %v1592
        %vm1594 = vweird.f32 %v1543
        %vm1595 = vweird.f32 %v1589
        %vm1596 = vmor %vm1594, %vm1595
        %v1597 = vsel %vm1596, %v1589, %v1593
        %v1598 = vand.u32 2147483647, %v1543
        %vm1599 = vcmp.eq.f32.partialorder %v1598, 8.507059e+37
        %v1600 = vand.u32 %v1543, 2147483648
        %v1601 = vor.u32 1.1754944e-38, %v1600
        %v1602 = vsel %vm1599, %v1601, %v1597
        %v1603 = vmul.f32 1.0, %v1602
        %v1604 = vrcp.pop %v1544
        %v1605 = vmul.f32 %v1544, %v1604
        %v1606 = vsub.f32 1.0, %v1605
        %v1607 = vmul.f32 %v1604, %v1606
        %v1608 = vadd.f32 %v1604, %v1607
        %vm1609 = vweird.f32 %v1544
        %vm1610 = vweird.f32 %v1604
        %vm1611 = vmor %vm1609, %vm1610
        %v1612 = vsel %vm1611, %v1604, %v1608
        %v1613 = vand.u32 2147483647, %v1544
        %vm1614 = vcmp.eq.f32.partialorder %v1613, 8.507059e+37
        %v1615 = vand.u32 %v1544, 2147483648
        %v1616 = vor.u32 1.1754944e-38, %v1615
        %v1617 = vsel %vm1614, %v1616, %v1612
        %v1618 = vmul.f32 1.0, %v1617
        %v1619 = vrcp.pop %v1545
        %v1620 = vmul.f32 %v1545, %v1619
        %v1621 = vsub.f32 1.0, %v1620
        %v1622 = vmul.f32 %v1619, %v1621
        %v1623 = vadd.f32 %v1619, %v1622
        %vm1624 = vweird.f32 %v1545
        %vm1625 = vweird.f32 %v1619
        %vm1626 = vmor %vm1624, %vm1625
        %v1627 = vsel %vm1626, %v1619, %v1623
        %v1628 = vand.u32 2147483647, %v1545
        %vm1629 = vcmp.eq.f32.partialorder %v1628, 8.507059e+37
        %v1630 = vand.u32 %v1545, 2147483648
        %v1631 = vor.u32 1.1754944e-38, %v1630
        %v1632 = vsel %vm1629, %v1631, %v1627
        %v1633 = vmul.f32 1.0, %v1632
        %v1634 = vrcp.pop %v1546
        %v1635 = vmul.f32 %v1546, %v1634
        %v1636 = vsub.f32 1.0, %v1635
        %v1637 = vmul.f32 %v1634, %v1636
        %v1638 = vadd.f32 %v1634, %v1637
        %vm1639 = vweird.f32 %v1546
        %vm1640 = vweird.f32 %v1634
        %vm1641 = vmor %vm1639, %vm1640
        %v1642 = vsel %vm1641, %v1634, %v1638
        %v1643 = vand.u32 2147483647, %v1546
        %vm1644 = vcmp.eq.f32.partialorder %v1643, 8.507059e+37
        %v1645 = vand.u32 %v1546, 2147483648
        %v1646 = vor.u32 1.1754944e-38, %v1645
        %v1647 = vsel %vm1644, %v1646, %v1642
        %v1648 = vmul.f32 1.0, %v1647
        %v1649 = vrcp.pop %v1547
        %v1650 = vmul.f32 %v1547, %v1649
        %v1651 = vsub.f32 1.0, %v1650
        %v1652 = vmul.f32 %v1649, %v1651
        %v1653 = vadd.f32 %v1649, %v1652
        %vm1654 = vweird.f32 %v1547
        %vm1655 = vweird.f32 %v1649
        %vm1656 = vmor %vm1654, %vm1655
        %v1657 = vsel %vm1656, %v1649, %v1653
        %v1658 = vand.u32 2147483647, %v1547
        %vm1659 = vcmp.eq.f32.partialorder %v1658, 8.507059e+37
        %v1660 = vand.u32 %v1547, 2147483648
        %v1661 = vor.u32 1.1754944e-38, %v1660
        %v1662 = vsel %vm1659, %v1661, %v1657
        %v1663 = vmul.f32 1.0, %v1662
        %v1664 = vrcp.pop %v1548
        %v1665 = vmul.f32 %v1548, %v1664
        %v1666 = vsub.f32 1.0, %v1665
        %v1667 = vmul.f32 %v1664, %v1666
        %v1668 = vadd.f32 %v1664, %v1667
        %vm1669 = vweird.f32 %v1548
        %vm1670 = vweird.f32 %v1664
        %vm1671 = vmor %vm1669, %vm1670
        %v1672 = vsel %vm1671, %v1664, %v1668
        %v1673 = vand.u32 2147483647, %v1548
        %vm1674 = vcmp.eq.f32.partialorder %v1673, 8.507059e+37
        %v1675 = vand.u32 %v1548, 2147483648
        %v1676 = vor.u32 1.1754944e-38, %v1675
        %v1677 = vsel %vm1674, %v1676, %v1672
        %v1678 = vmul.f32 1.0, %v1677
        %v1679 = vrcp.pop %v1549
        %v1680 = vmul.f32 %v1549, %v1679
        %v1681 = vsub.f32 1.0, %v1680
        %v1682 = vmul.f32 %v1679, %v1681
        %v1683 = vadd.f32 %v1679, %v1682
        %vm1684 = vweird.f32 %v1549
        %vm1685 = vweird.f32 %v1679
        %vm1686 = vmor %vm1684, %vm1685
        %v1687 = vsel %vm1686, %v1679, %v1683
        %v1688 = vand.u32 2147483647, %v1549
        %vm1689 = vcmp.eq.f32.partialorder %v1688, 8.507059e+37
        %v1690 = vand.u32 %v1549, 2147483648
        %v1691 = vor.u32 1.1754944e-38, %v1690
        %v1692 = vsel %vm1689, %v1691, %v1687
        %v1693 = vmul.f32 1.0, %v1692
        %v1694 = vrcp.pop %v1550
        %v1695 = vmul.f32 %v1550, %v1694
        %v1696 = vsub.f32 1.0, %v1695
        %v1697 = vmul.f32 %v1694, %v1696
        %v1698 = vadd.f32 %v1694, %v1697
        %vm1699 = vweird.f32 %v1550
        %vm1700 = vweird.f32 %v1694
        %vm1701 = vmor %vm1699, %vm1700
        %v1702 = vsel %vm1701, %v1694, %v1698
        %v1703 = vand.u32 2147483647, %v1550
        %vm1704 = vcmp.eq.f32.partialorder %v1703, 8.507059e+37
        %v1705 = vand.u32 %v1550, 2147483648
        %v1706 = vor.u32 1.1754944e-38, %v1705
        %v1707 = vsel %vm1704, %v1706, %v1702
        %v1708 = vmul.f32 1.0, %v1707
        %v1709 = vrcp.pop %v1551
        %v1710 = vmul.f32 %v1551, %v1709
        %v1711 = vsub.f32 1.0, %v1710
        %v1712 = vmul.f32 %v1709, %v1711
        %v1713 = vadd.f32 %v1709, %v1712
        %vm1714 = vweird.f32 %v1551
        %vm1715 = vweird.f32 %v1709
        %vm1716 = vmor %vm1714, %vm1715
        %v1717 = vsel %vm1716, %v1709, %v1713
        %v1718 = vand.u32 2147483647, %v1551
        %vm1719 = vcmp.eq.f32.partialorder %v1718, 8.507059e+37
        %v1720 = vand.u32 %v1551, 2147483648
        %v1721 = vor.u32 1.1754944e-38, %v1720
        %v1722 = vsel %vm1719, %v1721, %v1717
        %v1723 = vmul.f32 1.0, %v1722
        %v1724 = vrcp.pop %v1552
        %v1725 = vmul.f32 %v1552, %v1724
        %v1726 = vsub.f32 1.0, %v1725
        %v1727 = vmul.f32 %v1724, %v1726
        %v1728 = vadd.f32 %v1724, %v1727
        %vm1729 = vweird.f32 %v1552
        %vm1730 = vweird.f32 %v1724
        %vm1731 = vmor %vm1729, %vm1730
        %v1732 = vsel %vm1731, %v1724, %v1728
        %v1733 = vand.u32 2147483647, %v1552
        %vm1734 = vcmp.eq.f32.partialorder %v1733, 8.507059e+37
        %v1735 = vand.u32 %v1552, 2147483648
        %v1736 = vor.u32 1.1754944e-38, %v1735
        %v1737 = vsel %vm1734, %v1736, %v1732
        %v1738 = vmul.f32 1.0, %v1737
        %v1739 = vrcp.pop %v1553
        %v1740 = vmul.f32 %v1553, %v1739
        %v1741 = vsub.f32 1.0, %v1740
        %v1742 = vmul.f32 %v1739, %v1741
        %v1743 = vadd.f32 %v1739, %v1742
        %vm1744 = vweird.f32 %v1553
        %vm1745 = vweird.f32 %v1739
        %vm1746 = vmor %vm1744, %vm1745
        %v1747 = vsel %vm1746, %v1739, %v1743
        %v1748 = vand.u32 2147483647, %v1553
        %vm1749 = vcmp.eq.f32.partialorder %v1748, 8.507059e+37
        %v1750 = vand.u32 %v1553, 2147483648
        %v1751 = vor.u32 1.1754944e-38, %v1750
        %v1752 = vsel %vm1749, %v1751, %v1747
        %v1753 = vmul.f32 1.0, %v1752
        %v1754 = vrcp.pop %v1554
        %v1755 = vmul.f32 %v1554, %v1754
        %v1756 = vsub.f32 1.0, %v1755
        %v1757 = vmul.f32 %v1754, %v1756
        %v1758 = vadd.f32 %v1754, %v1757
        %vm1759 = vweird.f32 %v1554
        %vm1760 = vweird.f32 %v1754
        %vm1761 = vmor %vm1759, %vm1760
        %v1762 = vsel %vm1761, %v1754, %v1758
        %v1763 = vand.u32 2147483647, %v1554
        %vm1764 = vcmp.eq.f32.partialorder %v1763, 8.507059e+37
        %v1765 = vand.u32 %v1554, 2147483648
        %v1766 = vor.u32 1.1754944e-38, %v1765
        %v1767 = vsel %vm1764, %v1766, %v1762
        %v1768 = vmul.f32 1.0, %v1767
        %v1769 = vrcp.pop %v1555
        %v1770 = vmul.f32 %v1555, %v1769
        %v1771 = vsub.f32 1.0, %v1770
        %v1772 = vmul.f32 %v1769, %v1771
        %v1773 = vadd.f32 %v1769, %v1772
        %vm1774 = vweird.f32 %v1555
        %vm1775 = vweird.f32 %v1769
        %vm1776 = vmor %vm1774, %vm1775
        %v1777 = vsel %vm1776, %v1769, %v1773
        %v1778 = vand.u32 2147483647, %v1555
        %vm1779 = vcmp.eq.f32.partialorder %v1778, 8.507059e+37
        %v1780 = vand.u32 %v1555, 2147483648
        %v1781 = vor.u32 1.1754944e-38, %v1780
        %v1782 = vsel %vm1779, %v1781, %v1777
        %v1783 = vmul.f32 1.0, %v1782
        %v1784 = vrcp.pop %v1556
        %v1785 = vmul.f32 %v1556, %v1784
        %v1786 = vsub.f32 1.0, %v1785
        %v1787 = vmul.f32 %v1784, %v1786
        %v1788 = vadd.f32 %v1784, %v1787
        %vm1789 = vweird.f32 %v1556
        %vm1790 = vweird.f32 %v1784
        %vm1791 = vmor %vm1789, %vm1790
        %v1792 = vsel %vm1791, %v1784, %v1788
        %v1793 = vand.u32 2147483647, %v1556
        %vm1794 = vcmp.eq.f32.partialorder %v1793, 8.507059e+37
        %v1795 = vand.u32 %v1556, 2147483648
        %v1796 = vor.u32 1.1754944e-38, %v1795
        %v1797 = vsel %vm1794, %v1796, %v1792
        %v1798 = vmul.f32 1.0, %v1797
        %v1799 = vrcp.pop %v1557
        %v1800 = vmul.f32 %v1557, %v1799
        %v1801 = vsub.f32 1.0, %v1800
        %v1802 = vmul.f32 %v1799, %v1801
        %v1803 = vadd.f32 %v1799, %v1802
        %vm1804 = vweird.f32 %v1557
        %vm1805 = vweird.f32 %v1799
        %vm1806 = vmor %vm1804, %vm1805
        %v1807 = vsel %vm1806, %v1799, %v1803
        %v1808 = vand.u32 2147483647, %v1557
        %vm1809 = vcmp.eq.f32.partialorder %v1808, 8.507059e+37
        %v1810 = vand.u32 %v1557, 2147483648
        %v1811 = vor.u32 1.1754944e-38, %v1810
        %v1812 = vsel %vm1809, %v1811, %v1807
        %v1813 = vmul.f32 1.0, %v1812
        %v1814 = vrcp.pop %v1558
        %v1815 = vmul.f32 %v1558, %v1814
        %v1816 = vsub.f32 1.0, %v1815
        %v1817 = vmul.f32 %v1814, %v1816
        %v1818 = vadd.f32 %v1814, %v1817
        %vm1819 = vweird.f32 %v1558
        %vm1820 = vweird.f32 %v1814
        %vm1821 = vmor %vm1819, %vm1820
        %v1822 = vsel %vm1821, %v1814, %v1818
        %v1823 = vand.u32 2147483647, %v1558
        %vm1824 = vcmp.eq.f32.partialorder %v1823, 8.507059e+37
        %v1825 = vand.u32 %v1558, 2147483648
        %v1826 = vor.u32 1.1754944e-38, %v1825
        %v1827 = vsel %vm1824, %v1826, %v1822
        %v1828 = vmul.f32 1.0, %v1827
        %v1829 = vrcp.pop %v1559
        %v1830 = vmul.f32 %v1559, %v1829
        %v1831 = vsub.f32 1.0, %v1830
        %v1832 = vmul.f32 %v1829, %v1831
        %v1833 = vadd.f32 %v1829, %v1832
        %vm1834 = vweird.f32 %v1559
        %vm1835 = vweird.f32 %v1829
        %vm1836 = vmor %vm1834, %vm1835
        %v1837 = vsel %vm1836, %v1829, %v1833
        %v1838 = vand.u32 2147483647, %v1559
        %vm1839 = vcmp.eq.f32.partialorder %v1838, 8.507059e+37
        %v1840 = vand.u32 %v1559, 2147483648
        %v1841 = vor.u32 1.1754944e-38, %v1840
        %v1842 = vsel %vm1839, %v1841, %v1837
        %v1843 = vmul.f32 1.0, %v1842
        %v1844 = vrcp.pop %v1560
        %v1845 = vmul.f32 %v1560, %v1844
        %v1846 = vsub.f32 1.0, %v1845
        %v1847 = vmul.f32 %v1844, %v1846
        %v1848 = vadd.f32 %v1844, %v1847
        %vm1849 = vweird.f32 %v1560
        %vm1850 = vweird.f32 %v1844
        %vm1851 = vmor %vm1849, %vm1850
        %v1852 = vsel %vm1851, %v1844, %v1848
        %v1853 = vand.u32 2147483647, %v1560
        %vm1854 = vcmp.eq.f32.partialorder %v1853, 8.507059e+37
        %v1855 = vand.u32 %v1560, 2147483648
        %v1856 = vor.u32 1.1754944e-38, %v1855
        %v1857 = vsel %vm1854, %v1856, %v1852
        %v1858 = vmul.f32 1.0, %v1857
        %v1859 = vrcp.pop %v1561
        %v1860 = vmul.f32 %v1561, %v1859
        %v1861 = vsub.f32 1.0, %v1860
        %v1862 = vmul.f32 %v1859, %v1861
        %v1863 = vadd.f32 %v1859, %v1862
        %vm1864 = vweird.f32 %v1561
        %vm1865 = vweird.f32 %v1859
        %vm1866 = vmor %vm1864, %vm1865
        %v1867 = vsel %vm1866, %v1859, %v1863
        %v1868 = vand.u32 2147483647, %v1561
        %vm1869 = vcmp.eq.f32.partialorder %v1868, 8.507059e+37
        %v1870 = vand.u32 %v1561, 2147483648
        %v1871 = vor.u32 1.1754944e-38, %v1870
        %v1872 = vsel %vm1869, %v1871, %v1867
        %v1873 = vmul.f32 1.0, %v1872
        %v1874 = vrcp.pop %v1562
        %v1875 = vmul.f32 %v1562, %v1874
        %v1876 = vsub.f32 1.0, %v1875
        %v1877 = vmul.f32 %v1874, %v1876
        %v1878 = vadd.f32 %v1874, %v1877
        %vm1879 = vweird.f32 %v1562
        %vm1880 = vweird.f32 %v1874
        %vm1881 = vmor %vm1879, %vm1880
        %v1882 = vsel %vm1881, %v1874, %v1878
        %v1883 = vand.u32 2147483647, %v1562
        %vm1884 = vcmp.eq.f32.partialorder %v1883, 8.507059e+37
        %v1885 = vand.u32 %v1562, 2147483648
        %v1886 = vor.u32 1.1754944e-38, %v1885
        %v1887 = vsel %vm1884, %v1886, %v1882
        %v1888 = vmul.f32 1.0, %v1887
        %v1889 = vrcp.pop %v1563
        %v1890 = vmul.f32 %v1563, %v1889
        %v1891 = vsub.f32 1.0, %v1890
        %v1892 = vmul.f32 %v1889, %v1891
        %v1893 = vadd.f32 %v1889, %v1892
        %vm1894 = vweird.f32 %v1563
        %vm1895 = vweird.f32 %v1889
        %vm1896 = vmor %vm1894, %vm1895
        %v1897 = vsel %vm1896, %v1889, %v1893
        %v1898 = vand.u32 2147483647, %v1563
        %vm1899 = vcmp.eq.f32.partialorder %v1898, 8.507059e+37
        %v1900 = vand.u32 %v1563, 2147483648
        %v1901 = vor.u32 1.1754944e-38, %v1900
        %v1902 = vsel %vm1899, %v1901, %v1897
        %v1903 = vmul.f32 1.0, %v1902
        %v1904 = vrcp.pop %v1564
        %v1905 = vmul.f32 %v1564, %v1904
        %v1906 = vsub.f32 1.0, %v1905
        %v1907 = vmul.f32 %v1904, %v1906
        %v1908 = vadd.f32 %v1904, %v1907
        %vm1909 = vweird.f32 %v1564
        %vm1910 = vweird.f32 %v1904
        %vm1911 = vmor %vm1909, %vm1910
        %v1912 = vsel %vm1911, %v1904, %v1908
        %v1913 = vand.u32 2147483647, %v1564
        %vm1914 = vcmp.eq.f32.partialorder %v1913, 8.507059e+37
        %v1915 = vand.u32 %v1564, 2147483648
        %v1916 = vor.u32 1.1754944e-38, %v1915
        %v1917 = vsel %vm1914, %v1916, %v1912
        %v1918 = vmul.f32 1.0, %v1917
        %v1919 = vrcp.pop %v1565
        %v1920 = vmul.f32 %v1565, %v1919
        %v1921 = vsub.f32 1.0, %v1920
        %v1922 = vmul.f32 %v1919, %v1921
        %v1923 = vadd.f32 %v1919, %v1922
        %vm1924 = vweird.f32 %v1565
        %vm1925 = vweird.f32 %v1919
        %vm1926 = vmor %vm1924, %vm1925
        %v1927 = vsel %vm1926, %v1919, %v1923
        %v1928 = vand.u32 2147483647, %v1565
        %vm1929 = vcmp.eq.f32.partialorder %v1928, 8.507059e+37
        %v1930 = vand.u32 %v1565, 2147483648
        %v1931 = vor.u32 1.1754944e-38, %v1930
        %v1932 = vsel %vm1929, %v1931, %v1927
        %v1933 = vmul.f32 1.0, %v1932
        %v1934 = vrcp.pop %v1566
        %v1935 = vmul.f32 %v1566, %v1934
        %v1936 = vsub.f32 1.0, %v1935
        %v1937 = vmul.f32 %v1934, %v1936
        %v1938 = vadd.f32 %v1934, %v1937
        %vm1939 = vweird.f32 %v1566
        %vm1940 = vweird.f32 %v1934
        %vm1941 = vmor %vm1939, %vm1940
        %v1942 = vsel %vm1941, %v1934, %v1938
        %v1943 = vand.u32 2147483647, %v1566
        %vm1944 = vcmp.eq.f32.partialorder %v1943, 8.507059e+37
        %v1945 = vand.u32 %v1566, 2147483648
        %v1946 = vor.u32 1.1754944e-38, %v1945
        %v1947 = vsel %vm1944, %v1946, %v1942
        %v1948 = vmul.f32 1.0, %v1947
        %v1949 = vrcp.pop %v1567
        %v1950 = vmul.f32 %v1567, %v1949
        %v1951 = vsub.f32 1.0, %v1950
        %v1952 = vmul.f32 %v1949, %v1951
        %v1953 = vadd.f32 %v1949, %v1952
        %vm1954 = vweird.f32 %v1567
        %vm1955 = vweird.f32 %v1949
        %vm1956 = vmor %vm1954, %vm1955
        %v1957 = vsel %vm1956, %v1949, %v1953
        %v1958 = vand.u32 2147483647, %v1567
        %vm1959 = vcmp.eq.f32.partialorder %v1958, 8.507059e+37
        %v1960 = vand.u32 %v1567, 2147483648
        %v1961 = vor.u32 1.1754944e-38, %v1960
        %v1962 = vsel %vm1959, %v1961, %v1957
        %v1963 = vmul.f32 1.0, %v1962
        %v1964 = vrcp.pop %v1568
        %v1965 = vmul.f32 %v1568, %v1964
        %v1966 = vsub.f32 1.0, %v1965
        %v1967 = vmul.f32 %v1964, %v1966
        %v1968 = vadd.f32 %v1964, %v1967
        %vm1969 = vweird.f32 %v1568
        %vm1970 = vweird.f32 %v1964
        %vm1971 = vmor %vm1969, %vm1970
        %v1972 = vsel %vm1971, %v1964, %v1968
        %v1973 = vand.u32 2147483647, %v1568
        %vm1974 = vcmp.eq.f32.partialorder %v1973, 8.507059e+37
        %v1975 = vand.u32 %v1568, 2147483648
        %v1976 = vor.u32 1.1754944e-38, %v1975
        %v1977 = vsel %vm1974, %v1976, %v1972
        %v1978 = vmul.f32 1.0, %v1977
        %v1979 = vrcp.pop %v1569
        %v1980 = vmul.f32 %v1569, %v1979
        %v1981 = vsub.f32 1.0, %v1980
        %v1982 = vmul.f32 %v1979, %v1981
        %v1983 = vadd.f32 %v1979, %v1982
        %vm1984 = vweird.f32 %v1569
        %vm1985 = vweird.f32 %v1979
        %vm1986 = vmor %vm1984, %vm1985
        %v1987 = vsel %vm1986, %v1979, %v1983
        %v1988 = vand.u32 2147483647, %v1569
        %vm1989 = vcmp.eq.f32.partialorder %v1988, 8.507059e+37
        %v1990 = vand.u32 %v1569, 2147483648
        %v1991 = vor.u32 1.1754944e-38, %v1990
        %v1992 = vsel %vm1989, %v1991, %v1987
        %v1993 = vmul.f32 1.0, %v1992
        %v1994 = vrcp.pop %v1570
        %v1995 = vmul.f32 %v1570, %v1994
        %v1996 = vsub.f32 1.0, %v1995
        %v1997 = vmul.f32 %v1994, %v1996
        %v1998 = vadd.f32 %v1994, %v1997
        %vm1999 = vweird.f32 %v1570
        %vm2000 = vweird.f32 %v1994
        %vm2001 = vmor %vm1999, %vm2000
        %v2002 = vsel %vm2001, %v1994, %v1998
        %v2003 = vand.u32 2147483647, %v1570
        %vm2004 = vcmp.eq.f32.partialorder %v2003, 8.507059e+37
        %v2005 = vand.u32 %v1570, 2147483648
        %v2006 = vor.u32 1.1754944e-38, %v2005
        %v2007 = vsel %vm2004, %v2006, %v2002
        %v2008 = vmul.f32 1.0, %v2007
        %v2009 = vrcp.pop %v1571
        %v2010 = vmul.f32 %v1571, %v2009
        %v2011 = vsub.f32 1.0, %v2010
        %v2012 = vmul.f32 %v2009, %v2011
        %v2013 = vadd.f32 %v2009, %v2012
        %vm2014 = vweird.f32 %v1571
        %vm2015 = vweird.f32 %v2009
        %vm2016 = vmor %vm2014, %vm2015
        %v2017 = vsel %vm2016, %v2009, %v2013
        %v2018 = vand.u32 2147483647, %v1571
        %vm2019 = vcmp.eq.f32.partialorder %v2018, 8.507059e+37
        %v2020 = vand.u32 %v1571, 2147483648
        %v2021 = vor.u32 1.1754944e-38, %v2020
        %v2022 = vsel %vm2019, %v2021, %v2017
        %v2023 = vmul.f32 1.0, %v2022
        %v2024 = vrcp.pop %v1572
        %v2025 = vmul.f32 %v1572, %v2024
        %v2026 = vsub.f32 1.0, %v2025
        %v2027 = vmul.f32 %v2024, %v2026
        %v2028 = vadd.f32 %v2024, %v2027
        %vm2029 = vweird.f32 %v1572
        %vm2030 = vweird.f32 %v2024
        %vm2031 = vmor %vm2029, %vm2030
        %v2032 = vsel %vm2031, %v2024, %v2028
        %v2033 = vand.u32 2147483647, %v1572
        %vm2034 = vcmp.eq.f32.partialorder %v2033, 8.507059e+37
        %v2035 = vand.u32 %v1572, 2147483648
        %v2036 = vor.u32 1.1754944e-38, %v2035
        %v2037 = vsel %vm2034, %v2036, %v2032
        %v2038 = vmul.f32 1.0, %v2037
        %v2039 = vrcp.pop %v1573
        %v2040 = vmul.f32 %v1573, %v2039
        %v2041 = vsub.f32 1.0, %v2040
        %v2042 = vmul.f32 %v2039, %v2041
        %v2043 = vadd.f32 %v2039, %v2042
        %vm2044 = vweird.f32 %v1573
        %vm2045 = vweird.f32 %v2039
        %vm2046 = vmor %vm2044, %vm2045
        %v2047 = vsel %vm2046, %v2039, %v2043
        %v2048 = vand.u32 2147483647, %v1573
        %vm2049 = vcmp.eq.f32.partialorder %v2048, 8.507059e+37
        %v2050 = vand.u32 %v1573, 2147483648
        %v2051 = vor.u32 1.1754944e-38, %v2050
        %v2052 = vsel %vm2049, %v2051, %v2047
        %v2053 = vmul.f32 1.0, %v2052
        %v2054 = vmul.f32 %v1367, %v1588
        %v2055 = vmul.f32 %v1369, %v1603
        %v2056 = vmul.f32 %v1372, %v1618
        %v2057 = vmul.f32 %v1374, %v1633
        %v2058 = vmul.f32 %v1377, %v1648
        %v2059 = vmul.f32 %v1379, %v1663
        %v2060 = vmul.f32 %v1382, %v1678
        %v2061 = vmul.f32 %v1384, %v1693
        %v2062 = vmul.f32 %v1387, %v1708
        %v2063 = vmul.f32 %v1389, %v1723
        %v2064 = vmul.f32 %v1392, %v1738
        %v2065 = vmul.f32 %v1394, %v1753
        %v2066 = vmul.f32 %v1397, %v1768
        %v2067 = vmul.f32 %v1399, %v1783
        %v2068 = vmul.f32 %v1402, %v1798
        %v2069 = vmul.f32 %v1404, %v1813
        %v2070 = vmul.f32 %v1407, %v1828
        %v2071 = vmul.f32 %v1409, %v1843
        %v2072 = vmul.f32 %v1412, %v1858
        %v2073 = vmul.f32 %v1414, %v1873
        %v2074 = vmul.f32 %v1417, %v1888
        %v2075 = vmul.f32 %v1419, %v1903
        %v2076 = vmul.f32 %v1422, %v1918
        %v2077 = vmul.f32 %v1424, %v1933
        %v2078 = vmul.f32 %v1427, %v1948
        %v2079 = vmul.f32 %v1429, %v1963
        %v2080 = vmul.f32 %v1432, %v1978
        %v2081 = vmul.f32 %v1434, %v1993
        %v2082 = vmul.f32 %v1437, %v2008
        %v2083 = vmul.f32 %v1439, %v2023
        %v2084 = vmul.f32 %v1442, %v2038
        %v2085 = vmul.f32 %v1444, %v2053
        %v2086 = vadd.f32 %v2054, %v2055
        %v2087 = vadd.f32 %v2086, %v2056
        %v2088 = vadd.f32 %v2087, %v2057
        %v2089 = vadd.f32 %v2088, %v2058
        %v2090 = vadd.f32 %v2089, %v2059
        %v2091 = vadd.f32 %v2090, %v2060
        %v2092 = vadd.f32 %v2091, %v2061
        %v2093 = vadd.f32 %v2092, %v2062
        %v2094 = vadd.f32 %v2093, %v2063
        %v2095 = vadd.f32 %v2094, %v2064
        %v2096 = vadd.f32 %v2095, %v2065
        %v2097 = vadd.f32 %v2096, %v2066
        %v2098 = vadd.f32 %v2097, %v2067
        %v2099 = vadd.f32 %v2098, %v2068
        %v2100 = vadd.f32 %v2099, %v2069
        %v2101 = vadd.f32 %v2100, %v2070
        %v2102 = vadd.f32 %v2101, %v2071
        %v2103 = vadd.f32 %v2102, %v2072
        %v2104 = vadd.f32 %v2103, %v2073
        %v2105 = vadd.f32 %v2104, %v2074
        %v2106 = vadd.f32 %v2105, %v2075
        %v2107 = vadd.f32 %v2106, %v2076
        %v2108 = vadd.f32 %v2107, %v2077
        %v2109 = vadd.f32 %v2108, %v2078
        %v2110 = vadd.f32 %v2109, %v2079
        %v2111 = vadd.f32 %v2110, %v2080
        %v2112 = vadd.f32 %v2111, %v2081
        %v2113 = vadd.f32 %v2112, %v2082
        %v2114 = vadd.f32 %v2113, %v2083
        %v2115 = vadd.f32 %v2114, %v2084
        %v2116 = vadd.f32 %v2115, %v2085
        %v2117 = vrot.slane %v2116, 4
        %v2118 = vadd.f32 %v2116, %v2117
        %v2119 = vrot.slane %v2118, 2
        %v2120 = vadd.f32 %v2118, %v2119
        %v2121 = vrot.slane %v2120, 1
        %v2122 = vadd.f32 %v2120, %v2121
        %p2123 = scmp.eq.s32.totalorder %s23, 0
        // Predicated region
        $region82: #{forward.2} parent=76 // pred_check
          %p2124 = pneg %p2123
        $region83: #{forward.2} parent=76 // pred_check_branch
          %2126 = sbr.rel (%p2124) target = $region85
        $region84: #{forward.2} parent=76 // pred_region
          %2127 = vst [vmem:[%s354] sm:$0x1] 0.0
        $region85: #{forward.2} parent=76 // pred_fallthru
          _
        %v2128 = vld [vmem:[%s354] sm:$0x1]
        %v2129 = vadd.f32 %v2128, %v2122
        %2130 = vst [vmem:[%s354] sm:$0x1] %v2129
        // Predicated region
        $region86: #{forward.2} parent=76 // pred_check
          %p2131 = pneg %p2123
        $region87: #{forward.2} parent=76 // pred_check_branch
          %2133 = sbr.rel (%p2131) target = $region89
        $region88: #{forward.2} parent=76 // pred_region
          %v2134 = vld [vmem:[%s354] sm:$0x1]
          %v2135 = vmul.f32 %v2134, 0.00390625
          %2136 = vst [vmem:[%s354] sm:$0x1] %v2135
        $region89: #{forward.2} parent=76 // pred_fallthru
          _
        %p2137 = scmp.lt.s32.totalorder %s21, 1
        %s2138 = scalar_select %p2137, %s21, 1
        %p2139 = scmp.lt.s32.totalorder %s22, 10
        %s2140 = scalar_select %p2139, %s22, 10
        %s2141 = smul.addr %s2138, 11
        %s2142 = sadd.s32 %s2140, %s2141
        %s2143 = scalar_lea.vmem %s5, %s2142
        // Predicated region
        $region90: #{forward.2} parent=76 // pred_check
          %p2144 = pneg %p177
        $region91: #{forward.2} parent=76 // pred_check_branch
          %2146 = sbr.rel (%p2144) target = $region93
        $region92: #{forward.2} parent=76 // pred_region
          _
        $region93: #{forward.2} parent=76 // pred_fallthru
          _
      $region77: #{forward.2} parent=5 // pred_fallthru
        _
      %p2147 = scmp.le.s32.totalorder 2, %s11
      // Predicated region
      $region94: #{forward.2} parent=5 // pred_check
        %p2148 = pneg %p2147
      $region95: #{forward.2} parent=5 // pred_check_branch
        %2150 = sbr.rel (%p2148) target = $region97
      $region96: #{forward.2} parent=5 // pred_region
        %s2151 = ssub.s32 %s11, 2
        // Predicated region
        $region98: #{forward.2} parent=96 // pred_check
          %p2152 = pneg %p183
        $region99: #{forward.2} parent=96 // pred_check_branch
          %2154 = sbr.rel (%p2152) target = $region101
        $region100: #{forward.2} parent=96 // pred_region
          %p2155 = scmp.lt.s32.totalorder %s24, 1
          %s2156 = scalar_select %p2155, %s24, 1
          %p2157 = scmp.lt.s32.totalorder %s25, 10
          %s2158 = scalar_select %p2157, %s25, 10
          %s2159 = smul.addr %s2156, 11
          %s2160 = sadd.s32 %s2158, %s2159
          %s2161 = scalar_lea.vmem %s5, %s2160
        $region101: #{forward.2} parent=96 // pred_fallthru
          _
      $region97: #{forward.2} parent=5 // pred_fallthru
        _
    $region6: #{forward.2} parent=1 // loop_footer
      %s15 = sadd.s32 1, %s11
    $region7: #{forward.2} parent=1 // loop_footer_branch
      %10 = sbr.rel target = $region3
    $region8: #{forward.2} parent=1 // loop_exit
      _

</llo_original>
